<compile_context>
chip_gen: v5e
topology: v5e:2x2
jax: 0.10.0
libtpu: 0.0.40
codegen_flags: <defaults>
</compile_context>

<pallas_src>
import functools

import jax
import jax.numpy as jnp
from jax.experimental import pallas as pl
from jax.experimental.pallas import tpu as pltpu

# ----- small BERT-like config (hidden=32, seq=8, batch=2) -----
VOCAB = 100
HIDDEN = 32
N_LAYERS = 2
N_HEADS = 4
HEAD_DIM = HIDDEN // N_HEADS
INTER = 4 * HIDDEN           # 128 -> naturally lane-dense
MAX_POS = 16
N_CLASSES = 2
QKV_PAD = 128                # 3*HIDDEN = 96, padded to a full 128-lane vreg
LOGIT_PAD = 128              # lane-dense classifier output
LN_EPS = 1e-12

TB = 1                       # batch rows per grid step ("parallel" axis)


# ---------------------------------------------------------------------------
# In-kernel helpers (operate on values, not refs)
# ---------------------------------------------------------------------------
def _layernorm(x, g, b):
    mean = jnp.mean(x, axis=-1, keepdims=True)
    xc = x - mean
    var = jnp.mean(xc * xc, axis=-1, keepdims=True)
    return xc * jax.lax.rsqrt(var + LN_EPS) * g + b


def _gelu(y):
    # TODO(synk): HF BERT default is exact erf-GELU; tanh-approx GELU here
    # (EUP-friendly on TPU), numerically very close.
    c = 0.7978845608028654  # sqrt(2/pi)
    return 0.5 * y * (1.0 + jnp.tanh(c * (y + 0.044715 * y * y * y)))


# ---------------------------------------------------------------------------
# Fused forward kernel: embed (gather) + LN -> N encoder layers -> pooler -> head
# ---------------------------------------------------------------------------
def _fused_forward_kernel(tb, S,
                          ids_ref,                         # SMEM (B, S) int32 (scalar prefetch)
                          mask_ref,                        # (1, tb, S) int32
                          word_emb_ref, pos_type_ref,
                          emb_g_ref, emb_b_ref,
                          wqkv_ref, bqkv_ref, wo_ref, bo_ref,
                          ln1_g_ref, ln1_b_ref,
                          wi_ref, bi_ref, wout_ref, bout_ref,
                          ln2_g_ref, ln2_b_ref,
                          pool_w_ref, pool_b_ref,
                          cls_w_ref, cls_b_ref,
                          out_ref,                         # (1, tb, LOGIT_PAD)
                          emb_scratch):                    # VMEM (tb*S, HIDDEN)
    b0 = pl.program_id(0) * tb

    # ---- embedding gather fused in-kernel (token ids read from SMEM) ----
    for bb in range(tb):
        for s in range(S):
            tok = ids_ref[b0 + bb, s]
            emb_scratch[pl.ds(bb * S + s, 1), :] = word_emb_ref[pl.ds(tok, 1), :]
    x = emb_scratch[...]                                               # (tb*S, H)
    x = x.reshape(tb, S, HIDDEN) + pos_type_ref[pl.ds(0, S), :][None]  # + pos/type
    x = x.reshape(tb * S, HIDDEN)
    x = _layernorm(x, emb_g_ref[...], emb_b_ref[...])

    # ---- HF-style additive attention mask, built & broadcast ONCE ----
    maskf = mask_ref[...].reshape(tb, S).astype(jnp.float32)
    addmask = jnp.broadcast_to(((1.0 - maskf) * -10000.0).reshape(tb, 1, S),
                               (tb, S, S))
    scale = HEAD_DIM ** -0.5

    for l in range(N_LAYERS):
        # ---- self-attention: fused, lane-padded QKV projection (bf16 MXU) ----
        qkv = jnp.dot(x.astype(jnp.bfloat16), wqkv_ref[l],
                      preferred_element_type=jnp.float32) + bqkv_ref[l]  # (tb*S, 128)
        qkv3 = qkv.reshape(tb, S, QKV_PAD)

        ctx_heads = []
        for h in range(N_HEADS):
            lo = h * HEAD_DIM
            hi = lo + HEAD_DIM
            q_h = qkv3[:, :, lo:hi].astype(jnp.bfloat16)
            k_h = qkv3[:, :, HIDDEN + lo:HIDDEN + hi].astype(jnp.bfloat16)
            v_h = qkv3[:, :, 2 * HIDDEN + lo:2 * HIDDEN + hi].astype(jnp.bfloat16)

            s_h = jax.lax.dot_general(
                q_h, k_h, (((2,), (2,)), ((0,), (0,))),
                preferred_element_type=jnp.float32) * scale + addmask   # (tb, S, S)
            # no row-max subtraction: scores are bounded well below f32 range
            # and exp(-1e4) underflows to exactly 0 for masked keys.
            p = jnp.exp(s_h)
            p = p * pl.reciprocal(jnp.sum(p, axis=-1, keepdims=True), approx=True)

            ctx_heads.append(jax.lax.dot_general(
                p.astype(jnp.bfloat16), v_h, (((2,), (1,)), ((0,), (0,))),
                preferred_element_type=jnp.float32))                    # (tb, S, D)

        # single K=HIDDEN output projection (heads concatenated along lanes)
        ctx = jnp.concatenate(ctx_heads, axis=-1).reshape(tb * S, HIDDEN)
        attn_out = jnp.dot(ctx.astype(jnp.bfloat16), wo_ref[l],
                           preferred_element_type=jnp.float32) + bo_ref[l]
        x = _layernorm(x + attn_out, ln1_g_ref[l], ln1_b_ref[l])

        # ---- feed-forward ----
        inter = jnp.dot(x.astype(jnp.bfloat16), wi_ref[l],
                        preferred_element_type=jnp.float32) + bi_ref[l]
        inter = _gelu(inter)
        ffn = jnp.dot(inter.astype(jnp.bfloat16), wout_ref[l],
                      preferred_element_type=jnp.float32) + bout_ref[l]
        x = _layernorm(x + ffn, ln2_g_ref[l], ln2_b_ref[l])

    # ---- pooler on CLS token + classifier head (dropout p=0.3 = identity, eval) ----
    cls_rows = [x[bb * S:bb * S + 1, :] for bb in range(tb)]
    cls_tok = cls_rows[0] if tb == 1 else jnp.concatenate(cls_rows, axis=0)  # (tb, H)
    pooled = jnp.tanh(jnp.dot(cls_tok, pool_w_ref[...],
                              preferred_element_type=jnp.float32) + pool_b_ref[...])
    logits = jnp.dot(pooled, cls_w_ref[...],
                     preferred_element_type=jnp.float32) + cls_b_ref[...]    # (tb, 128)
    out_ref[...] = logits.reshape(1, tb, LOGIT_PAD).astype(out_ref.dtype)


# ---------------------------------------------------------------------------
# Parameter init (deterministic synthetic weights, pre-packed for the kernel)
# ---------------------------------------------------------------------------
def init_params(key):
    keys = iter(jax.random.split(key, 16))

    def nrm(shape):
        return jax.random.normal(next(keys), shape, jnp.float32) * 0.02

    word_emb = nrm((VOCAB, HIDDEN))
    pos_emb = nrm((MAX_POS, HIDDEN))
    type_emb = nrm((2, HIDDEN))

    wqkv = nrm((N_LAYERS, HIDDEN, 3 * HIDDEN))
    wqkv_pad = jnp.zeros((N_LAYERS, HIDDEN, QKV_PAD), jnp.float32)
    wqkv_pad = wqkv_pad.at[:, :, :3 * HIDDEN].set(wqkv)
    bqkv = nrm((N_LAYERS, 1, 3 * HIDDEN))
    bqkv_pad = jnp.zeros((N_LAYERS, 1, QKV_PAD), jnp.float32)
    bqkv_pad = bqkv_pad.at[:, :, :3 * HIDDEN].set(bqkv)

    cls_w = nrm((HIDDEN, N_CLASSES))
    cls_w_pad = jnp.zeros((HIDDEN, LOGIT_PAD), jnp.float32).at[:, :N_CLASSES].set(cls_w)
    cls_b = nrm((1, N_CLASSES))
    cls_b_pad = jnp.zeros((1, LOGIT_PAD), jnp.float32).at[:, :N_CLASSES].set(cls_b)

    return {
        "word_emb": word_emb,
        # position + (token_type 0) embeddings folded once at init (single-segment)
        "pos_type_emb": pos_emb + type_emb[0][None, :],
        "emb_ln_g": jnp.ones((1, HIDDEN), jnp.float32),
        "emb_ln_b": jnp.zeros((1, HIDDEN), jnp.float32),
        # per-layer weights stacked on a leading N_LAYERS axis; Q/K/V fused and
        # lane-padded to 128; all MXU operands stored in bf16 (f32 accumulation).
        "wqkv_pad": wqkv_pad.astype(jnp.bfloat16),
        "bqkv_pad": bqkv_pad,
        "wo": nrm((N_LAYERS, HIDDEN, HIDDEN)).astype(jnp.bfloat16),
        "bo": nrm((N_LAYERS, 1, HIDDEN)),
        "ln1_g": jnp.ones((N_LAYERS, 1, HIDDEN), jnp.float32),
        "ln1_b": jnp.zeros((N_LAYERS, 1, HIDDEN), jnp.float32),
        "wi": nrm((N_LAYERS, HIDDEN, INTER)).astype(jnp.bfloat16),
        "bi": nrm((N_LAYERS, 1, INTER)),
        "wout": nrm((N_LAYERS, INTER, HIDDEN)).astype(jnp.bfloat16),
        "bout": nrm((N_LAYERS, 1, HIDDEN)),
        "ln2_g": jnp.ones((N_LAYERS, 1, HIDDEN), jnp.float32),
        "ln2_b": jnp.zeros((N_LAYERS, 1, HIDDEN), jnp.float32),
        "pooler_w": nrm((HIDDEN, HIDDEN)),
        "pooler_b": nrm((1, HIDDEN)),
        "cls_w_pad": cls_w_pad,
        "cls_b_pad": cls_b_pad,
    }


# ---------------------------------------------------------------------------
# Forward pass (eval mode: dropout = identity)
# ---------------------------------------------------------------------------
def _resident(shape):
    """Full-array block, same block index every step -> VMEM-resident, DMA'd once."""
    zeros = (0,) * len(shape)
    return pl.BlockSpec(shape, lambda b, ids, _z=zeros: _z,
                        memory_space=pltpu.MemorySpace.VMEM)


@jax.jit
def bert_classifier_forward(params, input_ids, attention_mask):
    B, S = input_ids.shape
    n_bt = B // TB
    mask3 = attention_mask.astype(jnp.int32).reshape(n_bt, TB, S)

    p = params
    weights = (p["word_emb"], p["pos_type_emb"], p["emb_ln_g"], p["emb_ln_b"],
               p["wqkv_pad"], p["bqkv_pad"], p["wo"], p["bo"],
               p["ln1_g"], p["ln1_b"], p["wi"], p["bi"], p["wout"], p["bout"],
               p["ln2_g"], p["ln2_b"], p["pooler_w"], p["pooler_b"],
               p["cls_w_pad"], p["cls_b_pad"])

    grid_spec = pltpu.PrefetchScalarGridSpec(
        num_scalar_prefetch=1,                       # input_ids -> SMEM
        grid=(n_bt,),
        in_specs=[pl.BlockSpec((1, TB, S), lambda b, ids: (b, 0, 0),
                               memory_space=pltpu.MemorySpace.VMEM)]
                 + [_resident(w.shape) for w in weights],
        out_specs=pl.BlockSpec((1, TB, LOGIT_PAD), lambda b, ids: (b, 0, 0),
                               memory_space=pltpu.MemorySpace.VMEM),
        scratch_shapes=[pltpu.VMEM((TB * S, HIDDEN), jnp.float32)],
    )

    out = pl.pallas_call(
        functools.partial(_fused_forward_kernel, TB, S),
        grid_spec=grid_spec,
        out_shape=jax.ShapeDtypeStruct((n_bt, TB, LOGIT_PAD), jnp.float32),
        compiler_params=pltpu.CompilerParams(
            dimension_semantics=("parallel",)),      # shards batch across TCs on v7x
    )(input_ids.astype(jnp.int32), mask3, *weights)

    return out.reshape(B, LOGIT_PAD)[:, :N_CLASSES]


# ---------------------------------------------------------------------------
# Pure-JAX reference (same synthetic params, same bf16 matmul operands)
# ---------------------------------------------------------------------------
def reference_forward(params, input_ids, attention_mask):
    B, S = input_ids.shape
    f32 = jnp.float32
    bf = lambda t: t.astype(jnp.bfloat16)

    x = (params["word_emb"][input_ids]
         + params["pos_type_emb"][:S][None, :, :]).reshape(B * S, HIDDEN)
    x = _layernorm(x, params["emb_ln_g"], params["emb_ln_b"])
    addmask = ((1.0 - attention_mask.astype(f32)) * -10000.0)[:, None, None, :]

    for l in range(N_LAYERS):
        qkv = jnp.dot(bf(x), params["wqkv_pad"][l],
                      preferred_element_type=f32) + params["bqkv_pad"][l]
        q, k, v = jnp.split(qkv[:, :3 * HIDDEN], 3, axis=-1)
        heads = lambda t: t.reshape(B, S, N_HEADS, HEAD_DIM).transpose(0, 2, 1, 3)
        q, k, v = heads(q), heads(k), heads(v)
        s = jnp.einsum("bhqd,bhkd->bhqk", bf(q), bf(k),
                       preferred_element_type=f32) * (HEAD_DIM ** -0.5) + addmask
        pp = jax.nn.softmax(s, axis=-1)
        ctx = jnp.einsum("bhqk,bhkd->bhqd", bf(pp), bf(v),
                         preferred_element_type=f32
                         ).transpose(0, 2, 1, 3).reshape(B * S, HIDDEN)
        attn = jnp.dot(bf(ctx), params["wo"][l],
                       preferred_element_type=f32) + params["bo"][l]
        x = _layernorm(x + attn, params["ln1_g"][l], params["ln1_b"][l])
        inter = _gelu(jnp.dot(bf(x), params["wi"][l],
                              preferred_element_type=f32) + params["bi"][l])
        ffn = jnp.dot(bf(inter), params["wout"][l],
                      preferred_element_type=f32) + params["bout"][l]
        x = _layernorm(x + ffn, params["ln2_g"][l], params["ln2_b"][l])

    cls_tok = x.reshape(B, S, HIDDEN)[:, 0, :]
    pooled = jnp.tanh(cls_tok @ params["pooler_w"] + params["pooler_b"])
    return (pooled @ params["cls_w_pad"] + params["cls_b_pad"])[:, :N_CLASSES]


if __name__ == "__main__":
    key = jax.random.PRNGKey(0)
    pkey, ikey = jax.random.split(key)
    params = init_params(pkey)

    B, S = 2, 8
    input_ids = jax.random.randint(ikey, (B, S), 0, VOCAB, dtype=jnp.int32)
    attention_mask = jnp.array([[1, 1, 1, 1, 1, 1, 1, 1],
                                [1, 1, 1, 1, 1, 1, 0, 0]], dtype=jnp.int32)

    logits = bert_classifier_forward(params, input_ids, attention_mask)
    jax.block_until_ready(logits)
    assert logits.shape == (B, N_CLASSES)
    assert bool(jnp.all(jnp.isfinite(logits)))

    ref = reference_forward(params, input_ids, attention_mask)
    assert bool(jnp.allclose(logits, ref, atol=1e-2, rtol=1e-2)), (logits, ref)
    print("KERNEL_OK")
</pallas_src>

<mosaic_0001>
module attributes {stable_mosaic.version = 11 : i64} {
  func.func @_fused_forward_kernel(%arg0: i32, %arg1: memref<2x8xi32, #tpu.memory_space<smem>>, %arg2: memref<1x1x8xi32, #tpu.memory_space<vmem>>, %arg3: memref<100x32xf32, #tpu.memory_space<vmem>>, %arg4: memref<16x32xf32, #tpu.memory_space<vmem>>, %arg5: memref<1x32xf32, #tpu.memory_space<vmem>>, %arg6: memref<1x32xf32, #tpu.memory_space<vmem>>, %arg7: memref<2x32x128xbf16, #tpu.memory_space<vmem>>, %arg8: memref<2x1x128xf32, #tpu.memory_space<vmem>>, %arg9: memref<2x32x32xbf16, #tpu.memory_space<vmem>>, %arg10: memref<2x1x32xf32, #tpu.memory_space<vmem>>, %arg11: memref<2x1x32xf32, #tpu.memory_space<vmem>>, %arg12: memref<2x1x32xf32, #tpu.memory_space<vmem>>, %arg13: memref<2x32x128xbf16, #tpu.memory_space<vmem>>, %arg14: memref<2x1x128xf32, #tpu.memory_space<vmem>>, %arg15: memref<2x128x32xbf16, #tpu.memory_space<vmem>>, %arg16: memref<2x1x32xf32, #tpu.memory_space<vmem>>, %arg17: memref<2x1x32xf32, #tpu.memory_space<vmem>>, %arg18: memref<2x1x32xf32, #tpu.memory_space<vmem>>, %arg19: memref<32x32xf32, #tpu.memory_space<vmem>>, %arg20: memref<1x32xf32, #tpu.memory_space<vmem>>, %arg21: memref<32x128xf32, #tpu.memory_space<vmem>>, %arg22: memref<1x128xf32, #tpu.memory_space<vmem>>, %arg23: memref<1x1x128xf32, #tpu.memory_space<vmem>>, %arg24: memref<8x32xf32, #tpu.memory_space<vmem>>) attributes {dimension_semantics = [#tpu.dimension_semantics<parallel>], iteration_bounds = array<i64: 2>, scalar_prefetch = 1 : i64, scratch_operands = 1 : i64, tpu.core_type = #tpu.core_type<tc>, window_params = [{transform_indices = @transform_0, window_bounds = array<i64: 1, 1, 8>}, {pipeline_mode = #tpu.pipeline_mode<synchronous>, transform_indices = @transform_1, window_bounds = array<i64: 100, 32>}, {pipeline_mode = #tpu.pipeline_mode<synchronous>, transform_indices = @transform_2, window_bounds = array<i64: 16, 32>}, {pipeline_mode = #tpu.pipeline_mode<synchronous>, transform_indices = @transform_3, window_bounds = array<i64: 1, 32>}, {pipeline_mode = #tpu.pipeline_mode<synchronous>, transform_indices = @transform_4, window_bounds = array<i64: 1, 32>}, {pipeline_mode = #tpu.pipeline_mode<synchronous>, transform_indices = @transform_5, window_bounds = array<i64: 2, 32, 128>}, {pipeline_mode = #tpu.pipeline_mode<synchronous>, transform_indices = @transform_6, window_bounds = array<i64: 2, 1, 128>}, {pipeline_mode = #tpu.pipeline_mode<synchronous>, transform_indices = @transform_7, window_bounds = array<i64: 2, 32, 32>}, {pipeline_mode = #tpu.pipeline_mode<synchronous>, transform_indices = @transform_8, window_bounds = array<i64: 2, 1, 32>}, {pipeline_mode = #tpu.pipeline_mode<synchronous>, transform_indices = @transform_9, window_bounds = array<i64: 2, 1, 32>}, {pipeline_mode = #tpu.pipeline_mode<synchronous>, transform_indices = @transform_10, window_bounds = array<i64: 2, 1, 32>}, {pipeline_mode = #tpu.pipeline_mode<synchronous>, transform_indices = @transform_11, window_bounds = array<i64: 2, 32, 128>}, {pipeline_mode = #tpu.pipeline_mode<synchronous>, transform_indices = @transform_12, window_bounds = array<i64: 2, 1, 128>}, {pipeline_mode = #tpu.pipeline_mode<synchronous>, transform_indices = @transform_13, window_bounds = array<i64: 2, 128, 32>}, {pipeline_mode = #tpu.pipeline_mode<synchronous>, transform_indices = @transform_14, window_bounds = array<i64: 2, 1, 32>}, {pipeline_mode = #tpu.pipeline_mode<synchronous>, transform_indices = @transform_15, window_bounds = array<i64: 2, 1, 32>}, {pipeline_mode = #tpu.pipeline_mode<synchronous>, transform_indices = @transform_16, window_bounds = array<i64: 2, 1, 32>}, {pipeline_mode = #tpu.pipeline_mode<synchronous>, transform_indices = @transform_17, window_bounds = array<i64: 32, 32>}, {pipeline_mode = #tpu.pipeline_mode<synchronous>, transform_indices = @transform_18, window_bounds = array<i64: 1, 32>}, {pipeline_mode = #tpu.pipeline_mode<synchronous>, transform_indices = @transform_19, window_bounds = array<i64: 32, 128>}, {pipeline_mode = #tpu.pipeline_mode<synchronous>, transform_indices = @transform_20, window_bounds = array<i64: 1, 128>}, {transform_indices = @transform_21, window_bounds = array<i64: 1, 1, 128>}]} {
    %c1_i32 = arith.constant 1 : i32
    %0 = arith.muli %arg0, %c1_i32 : i32
    %c0_i32 = arith.constant 0 : i32
    %1 = arith.addi %0, %c0_i32 : i32
    %2 = arith.index_cast %1 : i32 to index
    %c0 = arith.constant 0 : index
    %3 = memref.load %arg1[%2, %c0] : memref<2x8xi32, #tpu.memory_space<smem>>
    %4 = arith.index_cast %3 : i32 to index
    %c0_0 = arith.constant 0 : index
    %5 = vector.load %arg3[%4, %c0_0] : memref<100x32xf32, #tpu.memory_space<vmem>>, vector<1x32xf32>
    %c0_1 = arith.constant 0 : index
    %c0_2 = arith.constant 0 : index
    %6 = vector.load %arg24[%c0_1, %c0_2] : memref<8x32xf32, #tpu.memory_space<vmem>>, vector<1x32xf32>
    tpu.vector_store %arg24[%c0_1, %c0_2], %5 {strides = array<i32>} : memref<8x32xf32, #tpu.memory_space<vmem>>, vector<1x32xf32>,
    %c0_i32_3 = arith.constant 0 : i32
    %7 = arith.addi %0, %c0_i32_3 : i32
    %8 = arith.index_cast %7 : i32 to index
    %c1 = arith.constant 1 : index
    %9 = memref.load %arg1[%8, %c1] : memref<2x8xi32, #tpu.memory_space<smem>>
    %10 = arith.index_cast %9 : i32 to index
    %c0_4 = arith.constant 0 : index
    %11 = vector.load %arg3[%10, %c0_4] : memref<100x32xf32, #tpu.memory_space<vmem>>, vector<1x32xf32>
    %c1_5 = arith.constant 1 : index
    %c0_6 = arith.constant 0 : index
    %12 = vector.load %arg24[%c1_5, %c0_6] : memref<8x32xf32, #tpu.memory_space<vmem>>, vector<1x32xf32>
    tpu.vector_store %arg24[%c1_5, %c0_6], %11 {strides = array<i32>} : memref<8x32xf32, #tpu.memory_space<vmem>>, vector<1x32xf32>,
    %c0_i32_7 = arith.constant 0 : i32
    %13 = arith.addi %0, %c0_i32_7 : i32
    %14 = arith.index_cast %13 : i32 to index
    %c2 = arith.constant 2 : index
    %15 = memref.load %arg1[%14, %c2] : memref<2x8xi32, #tpu.memory_space<smem>>
    %16 = arith.index_cast %15 : i32 to index
    %c0_8 = arith.constant 0 : index
    %17 = vector.load %arg3[%16, %c0_8] : memref<100x32xf32, #tpu.memory_space<vmem>>, vector<1x32xf32>
    %c2_9 = arith.constant 2 : index
    %c0_10 = arith.constant 0 : index
    %18 = vector.load %arg24[%c2_9, %c0_10] : memref<8x32xf32, #tpu.memory_space<vmem>>, vector<1x32xf32>
    tpu.vector_store %arg24[%c2_9, %c0_10], %17 {strides = array<i32>} : memref<8x32xf32, #tpu.memory_space<vmem>>, vector<1x32xf32>,
    %c0_i32_11 = arith.constant 0 : i32
    %19 = arith.addi %0, %c0_i32_11 : i32
    %20 = arith.index_cast %19 : i32 to index
    %c3 = arith.constant 3 : index
    %21 = memref.load %arg1[%20, %c3] : memref<2x8xi32, #tpu.memory_space<smem>>
    %22 = arith.index_cast %21 : i32 to index
    %c0_12 = arith.constant 0 : index
    %23 = vector.load %arg3[%22, %c0_12] : memref<100x32xf32, #tpu.memory_space<vmem>>, vector<1x32xf32>
    %c3_13 = arith.constant 3 : index
    %c0_14 = arith.constant 0 : index
    %24 = vector.load %arg24[%c3_13, %c0_14] : memref<8x32xf32, #tpu.memory_space<vmem>>, vector<1x32xf32>
    tpu.vector_store %arg24[%c3_13, %c0_14], %23 {strides = array<i32>} : memref<8x32xf32, #tpu.memory_space<vmem>>, vector<1x32xf32>,
    %c0_i32_15 = arith.constant 0 : i32
    %25 = arith.addi %0, %c0_i32_15 : i32
    %26 = arith.index_cast %25 : i32 to index
    %c4 = arith.constant 4 : index
    %27 = memref.load %arg1[%26, %c4] : memref<2x8xi32, #tpu.memory_space<smem>>
    %28 = arith.index_cast %27 : i32 to index
    %c0_16 = arith.constant 0 : index
    %29 = vector.load %arg3[%28, %c0_16] : memref<100x32xf32, #tpu.memory_space<vmem>>, vector<1x32xf32>
    %c4_17 = arith.constant 4 : index
    %c0_18 = arith.constant 0 : index
    %30 = vector.load %arg24[%c4_17, %c0_18] : memref<8x32xf32, #tpu.memory_space<vmem>>, vector<1x32xf32>
    tpu.vector_store %arg24[%c4_17, %c0_18], %29 {strides = array<i32>} : memref<8x32xf32, #tpu.memory_space<vmem>>, vector<1x32xf32>,
    %c0_i32_19 = arith.constant 0 : i32
    %31 = arith.addi %0, %c0_i32_19 : i32
    %32 = arith.index_cast %31 : i32 to index
    %c5 = arith.constant 5 : index
    %33 = memref.load %arg1[%32, %c5] : memref<2x8xi32, #tpu.memory_space<smem>>
    %34 = arith.index_cast %33 : i32 to index
    %c0_20 = arith.constant 0 : index
    %35 = vector.load %arg3[%34, %c0_20] : memref<100x32xf32, #tpu.memory_space<vmem>>, vector<1x32xf32>
    %c5_21 = arith.constant 5 : index
    %c0_22 = arith.constant 0 : index
    %36 = vector.load %arg24[%c5_21, %c0_22] : memref<8x32xf32, #tpu.memory_space<vmem>>, vector<1x32xf32>
    tpu.vector_store %arg24[%c5_21, %c0_22], %35 {strides = array<i32>} : memref<8x32xf32, #tpu.memory_space<vmem>>, vector<1x32xf32>,
    %c0_i32_23 = arith.constant 0 : i32
    %37 = arith.addi %0, %c0_i32_23 : i32
    %38 = arith.index_cast %37 : i32 to index
    %c6 = arith.constant 6 : index
    %39 = memref.load %arg1[%38, %c6] : memref<2x8xi32, #tpu.memory_space<smem>>
    %40 = arith.index_cast %39 : i32 to index
    %c0_24 = arith.constant 0 : index
    %41 = vector.load %arg3[%40, %c0_24] : memref<100x32xf32, #tpu.memory_space<vmem>>, vector<1x32xf32>
    %c6_25 = arith.constant 6 : index
    %c0_26 = arith.constant 0 : index
    %42 = vector.load %arg24[%c6_25, %c0_26] : memref<8x32xf32, #tpu.memory_space<vmem>>, vector<1x32xf32>
    tpu.vector_store %arg24[%c6_25, %c0_26], %41 {strides = array<i32>} : memref<8x32xf32, #tpu.memory_space<vmem>>, vector<1x32xf32>,
    %c0_i32_27 = arith.constant 0 : i32
    %43 = arith.addi %0, %c0_i32_27 : i32
    %44 = arith.index_cast %43 : i32 to index
    %c7 = arith.constant 7 : index
    %45 = memref.load %arg1[%44, %c7] : memref<2x8xi32, #tpu.memory_space<smem>>
    %46 = arith.index_cast %45 : i32 to index
    %c0_28 = arith.constant 0 : index
    %47 = vector.load %arg3[%46, %c0_28] : memref<100x32xf32, #tpu.memory_space<vmem>>, vector<1x32xf32>
    %c7_29 = arith.constant 7 : index
    %c0_30 = arith.constant 0 : index
    %48 = vector.load %arg24[%c7_29, %c0_30] : memref<8x32xf32, #tpu.memory_space<vmem>>, vector<1x32xf32>
    tpu.vector_store %arg24[%c7_29, %c0_30], %47 {strides = array<i32>} : memref<8x32xf32, #tpu.memory_space<vmem>>, vector<1x32xf32>,
    %c0_31 = arith.constant 0 : index
    %c0_32 = arith.constant 0 : index
    %49 = vector.load %arg24[%c0_31, %c0_32] : memref<8x32xf32, #tpu.memory_space<vmem>>, vector<8x32xf32>
    %50 = vector.shape_cast %49 : vector<8x32xf32> to vector<1x8x32xf32>
    %c0_33 = arith.constant 0 : index
    %c0_34 = arith.constant 0 : index
    %51 = vector.load %arg4[%c0_33, %c0_34] : memref<16x32xf32, #tpu.memory_space<vmem>>, vector<8x32xf32>
    %52 = vector.shape_cast %51 : vector<8x32xf32> to vector<1x8x32xf32>
    %53 = arith.addf %50, %52 : vector<1x8x32xf32>
    %54 = vector.shape_cast %53 : vector<1x8x32xf32> to vector<8x32xf32>
    %c0_35 = arith.constant 0 : index
    %c0_36 = arith.constant 0 : index
    %55 = vector.load %arg5[%c0_35, %c0_36] : memref<1x32xf32, #tpu.memory_space<vmem>>, vector<1x32xf32>
    %c0_37 = arith.constant 0 : index
    %c0_38 = arith.constant 0 : index
    %56 = vector.load %arg6[%c0_37, %c0_38] : memref<1x32xf32, #tpu.memory_space<vmem>>, vector<1x32xf32>
    %cst = arith.constant dense<0.000000e+00> : vector<8xf32>
    %57 = vector.multi_reduction <add>, %54, %cst [1] : vector<8x32xf32> to vector<8xf32>
    %58 = vector.shape_cast %57 : vector<8xf32> to vector<8x1xf32>
    %cst_39 = arith.constant 3.200000e+01 : f32
    %59 = vector.broadcast %cst_39 : f32 to vector<8x1xf32>
    %60 = arith.divf %58, %59 : vector<8x1xf32>
    %61 = vector.broadcast %60 : vector<8x1xf32> to vector<8x32xf32>
    %62 = arith.subf %54, %61 : vector<8x32xf32>
    %63 = arith.mulf %62, %62 : vector<8x32xf32>
    %cst_40 = arith.constant dense<0.000000e+00> : vector<8xf32>
    %64 = vector.multi_reduction <add>, %63, %cst_40 [1] : vector<8x32xf32> to vector<8xf32>
    %65 = vector.shape_cast %64 : vector<8xf32> to vector<8x1xf32>
    %cst_41 = arith.constant 3.200000e+01 : f32
    %66 = vector.broadcast %cst_41 : f32 to vector<8x1xf32>
    %67 = arith.divf %65, %66 : vector<8x1xf32>
    %cst_42 = arith.constant 9.99999996E-13 : f32
    %68 = vector.broadcast %cst_42 : f32 to vector<8x1xf32>
    %69 = arith.addf %67, %68 : vector<8x1xf32>
    %70 = math.rsqrt %69 : vector<8x1xf32>
    %71 = vector.broadcast %70 : vector<8x1xf32> to vector<8x32xf32>
    %72 = arith.mulf %62, %71 : vector<8x32xf32>
    %73 = vector.broadcast %55 : vector<1x32xf32> to vector<8x32xf32>
    %74 = arith.mulf %72, %73 : vector<8x32xf32>
    %75 = vector.broadcast %56 : vector<1x32xf32> to vector<8x32xf32>
    %76 = arith.addf %74, %75 : vector<8x32xf32>
    %c0_43 = arith.constant 0 : index
    %c0_44 = arith.constant 0 : index
    %c0_45 = arith.constant 0 : index
    %77 = vector.load %arg2[%c0_43, %c0_44, %c0_45] : memref<1x1x8xi32, #tpu.memory_space<vmem>>, vector<1x1x8xi32>
    %78 = vector.shape_cast %77 : vector<1x1x8xi32> to vector<1x8xi32>
    %79 = arith.sitofp %78 : vector<1x8xi32> to vector<1x8xf32>
    %cst_46 = arith.constant 1.000000e+00 : f32
    %80 = vector.broadcast %cst_46 : f32 to vector<1x8xf32>
    %81 = arith.subf %80, %79 : vector<1x8xf32>
    %cst_47 = arith.constant -1.000000e+04 : f32
    %82 = vector.broadcast %cst_47 : f32 to vector<1x8xf32>
    %83 = arith.mulf %81, %82 : vector<1x8xf32>
    %84 = vector.shape_cast %83 : vector<1x8xf32> to vector<1x1x8xf32>
    %85 = vector.shape_cast %84 : vector<1x1x8xf32> to vector<1x1x8xf32>
    %86 = vector.broadcast %85 : vector<1x1x8xf32> to vector<1x8x8xf32>
    %87 = arith.truncf %76 : vector<8x32xf32> to vector<8x32xbf16>
    %c0_48 = arith.constant 0 : index
    %c0_49 = arith.constant 0 : index
    %c0_50 = arith.constant 0 : index
    %88 = vector.load %arg7[%c0_48, %c0_49, %c0_50] : memref<2x32x128xbf16, #tpu.memory_space<vmem>>, vector<1x32x128xbf16>
    %89 = vector.shape_cast %88 : vector<1x32x128xbf16> to vector<32x128xbf16>
    %cst_51 = arith.constant dense<0.000000e+00> : vector<8x128xf32>
    %90 = tpu.matmul %87, %89, %cst_51 {dimension_numbers = #tpu.dot_dimension_numbers<[1], [0], [0], [1], [0, 0, 1, 1], [], []>} : vector<8x32xbf16>, vector<32x128xbf16>, vector<8x128xf32> -> vector<8x128xf32>
    %c0_52 = arith.constant 0 : index
    %c0_53 = arith.constant 0 : index
    %c0_54 = arith.constant 0 : index
    %91 = vector.load %arg8[%c0_52, %c0_53, %c0_54] : memref<2x1x128xf32, #tpu.memory_space<vmem>>, vector<1x1x128xf32>
    %92 = vector.shape_cast %91 : vector<1x1x128xf32> to vector<1x128xf32>
    %93 = vector.broadcast %92 : vector<1x128xf32> to vector<8x128xf32>
    %94 = arith.addf %90, %93 : vector<8x128xf32>
    %95 = vector.shape_cast %94 : vector<8x128xf32> to vector<1x8x128xf32>
    %96 = vector.extract_strided_slice %95 {offsets = [0, 0, 0], sizes = [1, 8, 8], strides = [1, 1, 1]} : vector<1x8x128xf32> to vector<1x8x8xf32>
    %97 = arith.truncf %96 : vector<1x8x8xf32> to vector<1x8x8xbf16>
    %98 = vector.extract_strided_slice %95 {offsets = [0, 0, 32], sizes = [1, 8, 8], strides = [1, 1, 1]} : vector<1x8x128xf32> to vector<1x8x8xf32>
    %99 = arith.truncf %98 : vector<1x8x8xf32> to vector<1x8x8xbf16>
    %100 = vector.extract_strided_slice %95 {offsets = [0, 0, 64], sizes = [1, 8, 8], strides = [1, 1, 1]} : vector<1x8x128xf32> to vector<1x8x8xf32>
    %101 = arith.truncf %100 : vector<1x8x8xf32> to vector<1x8x8xbf16>
    %cst_55 = arith.constant dense<0.000000e+00> : vector<1x8x8xf32>
    %102 = tpu.matmul %97, %99, %cst_55 {dimension_numbers = #tpu.dot_dimension_numbers<[2], [2], [1], [1], [0, 0, 0, 1, 1, 1], [0], [0]>} : vector<1x8x8xbf16>, vector<1x8x8xbf16>, vector<1x8x8xf32> -> vector<1x8x8xf32>
    %cst_56 = arith.constant 0.353553385 : f32
    %103 = vector.broadcast %cst_56 : f32 to vector<1x8x8xf32>
    %104 = arith.mulf %102, %103 : vector<1x8x8xf32>
    %105 = arith.addf %104, %86 : vector<1x8x8xf32>
    %106 = math.exp %105 : vector<1x8x8xf32>
    %cst_57 = arith.constant dense<0.000000e+00> : vector<1x8xf32>
    %107 = vector.multi_reduction <add>, %106, %cst_57 [2] : vector<1x8x8xf32> to vector<1x8xf32>
    %108 = vector.shape_cast %107 : vector<1x8xf32> to vector<1x8x1xf32>
    %109 = tpu.reciprocal %108 {approx = true} : vector<1x8x1xf32> -> vector<1x8x1xf32>
    %110 = vector.broadcast %109 : vector<1x8x1xf32> to vector<1x8x8xf32>
    %111 = arith.mulf %106, %110 : vector<1x8x8xf32>
    %112 = arith.truncf %111 : vector<1x8x8xf32> to vector<1x8x8xbf16>
    %cst_58 = arith.constant dense<0.000000e+00> : vector<1x8x8xf32>
    %113 = tpu.matmul %112, %101, %cst_58 {dimension_numbers = #tpu.dot_dimension_numbers<[2], [1], [1], [2], [0, 0, 0, 1, 1, 2], [0], [0]>} : vector<1x8x8xbf16>, vector<1x8x8xbf16>, vector<1x8x8xf32> -> vector<1x8x8xf32>
    %114 = vector.extract_strided_slice %95 {offsets = [0, 0, 8], sizes = [1, 8, 8], strides = [1, 1, 1]} : vector<1x8x128xf32> to vector<1x8x8xf32>
    %115 = arith.truncf %114 : vector<1x8x8xf32> to vector<1x8x8xbf16>
    %116 = vector.extract_strided_slice %95 {offsets = [0, 0, 40], sizes = [1, 8, 8], strides = [1, 1, 1]} : vector<1x8x128xf32> to vector<1x8x8xf32>
    %117 = arith.truncf %116 : vector<1x8x8xf32> to vector<1x8x8xbf16>
    %118 = vector.extract_strided_slice %95 {offsets = [0, 0, 72], sizes = [1, 8, 8], strides = [1, 1, 1]} : vector<1x8x128xf32> to vector<1x8x8xf32>
    %119 = arith.truncf %118 : vector<1x8x8xf32> to vector<1x8x8xbf16>
    %cst_59 = arith.constant dense<0.000000e+00> : vector<1x8x8xf32>
    %120 = tpu.matmul %115, %117, %cst_59 {dimension_numbers = #tpu.dot_dimension_numbers<[2], [2], [1], [1], [0, 0, 0, 1, 1, 1], [0], [0]>} : vector<1x8x8xbf16>, vector<1x8x8xbf16>, vector<1x8x8xf32> -> vector<1x8x8xf32>
    %cst_60 = arith.constant 0.353553385 : f32
    %121 = vector.broadcast %cst_60 : f32 to vector<1x8x8xf32>
    %122 = arith.mulf %120, %121 : vector<1x8x8xf32>
    %123 = arith.addf %122, %86 : vector<1x8x8xf32>
    %124 = math.exp %123 : vector<1x8x8xf32>
    %cst_61 = arith.constant dense<0.000000e+00> : vector<1x8xf32>
    %125 = vector.multi_reduction <add>, %124, %cst_61 [2] : vector<1x8x8xf32> to vector<1x8xf32>
    %126 = vector.shape_cast %125 : vector<1x8xf32> to vector<1x8x1xf32>
    %127 = tpu.reciprocal %126 {approx = true} : vector<1x8x1xf32> -> vector<1x8x1xf32>
    %128 = vector.broadcast %127 : vector<1x8x1xf32> to vector<1x8x8xf32>
    %129 = arith.mulf %124, %128 : vector<1x8x8xf32>
    %130 = arith.truncf %129 : vector<1x8x8xf32> to vector<1x8x8xbf16>
    %cst_62 = arith.constant dense<0.000000e+00> : vector<1x8x8xf32>
    %131 = tpu.matmul %130, %119, %cst_62 {dimension_numbers = #tpu.dot_dimension_numbers<[2], [1], [1], [2], [0, 0, 0, 1, 1, 2], [0], [0]>} : vector<1x8x8xbf16>, vector<1x8x8xbf16>, vector<1x8x8xf32> -> vector<1x8x8xf32>
    %132 = vector.extract_strided_slice %95 {offsets = [0, 0, 16], sizes = [1, 8, 8], strides = [1, 1, 1]} : vector<1x8x128xf32> to vector<1x8x8xf32>
    %133 = arith.truncf %132 : vector<1x8x8xf32> to vector<1x8x8xbf16>
    %134 = vector.extract_strided_slice %95 {offsets = [0, 0, 48], sizes = [1, 8, 8], strides = [1, 1, 1]} : vector<1x8x128xf32> to vector<1x8x8xf32>
    %135 = arith.truncf %134 : vector<1x8x8xf32> to vector<1x8x8xbf16>
    %136 = vector.extract_strided_slice %95 {offsets = [0, 0, 80], sizes = [1, 8, 8], strides = [1, 1, 1]} : vector<1x8x128xf32> to vector<1x8x8xf32>
    %137 = arith.truncf %136 : vector<1x8x8xf32> to vector<1x8x8xbf16>
    %cst_63 = arith.constant dense<0.000000e+00> : vector<1x8x8xf32>
    %138 = tpu.matmul %133, %135, %cst_63 {dimension_numbers = #tpu.dot_dimension_numbers<[2], [2], [1], [1], [0, 0, 0, 1, 1, 1], [0], [0]>} : vector<1x8x8xbf16>, vector<1x8x8xbf16>, vector<1x8x8xf32> -> vector<1x8x8xf32>
    %cst_64 = arith.constant 0.353553385 : f32
    %139 = vector.broadcast %cst_64 : f32 to vector<1x8x8xf32>
    %140 = arith.mulf %138, %139 : vector<1x8x8xf32>
    %141 = arith.addf %140, %86 : vector<1x8x8xf32>
    %142 = math.exp %141 : vector<1x8x8xf32>
    %cst_65 = arith.constant dense<0.000000e+00> : vector<1x8xf32>
    %143 = vector.multi_reduction <add>, %142, %cst_65 [2] : vector<1x8x8xf32> to vector<1x8xf32>
    %144 = vector.shape_cast %143 : vector<1x8xf32> to vector<1x8x1xf32>
    %145 = tpu.reciprocal %144 {approx = true} : vector<1x8x1xf32> -> vector<1x8x1xf32>
    %146 = vector.broadcast %145 : vector<1x8x1xf32> to vector<1x8x8xf32>
    %147 = arith.mulf %142, %146 : vector<1x8x8xf32>
    %148 = arith.truncf %147 : vector<1x8x8xf32> to vector<1x8x8xbf16>
    %cst_66 = arith.constant dense<0.000000e+00> : vector<1x8x8xf32>
    %149 = tpu.matmul %148, %137, %cst_66 {dimension_numbers = #tpu.dot_dimension_numbers<[2], [1], [1], [2], [0, 0, 0, 1, 1, 2], [0], [0]>} : vector<1x8x8xbf16>, vector<1x8x8xbf16>, vector<1x8x8xf32> -> vector<1x8x8xf32>
    %150 = vector.extract_strided_slice %95 {offsets = [0, 0, 24], sizes = [1, 8, 8], strides = [1, 1, 1]} : vector<1x8x128xf32> to vector<1x8x8xf32>
    %151 = arith.truncf %150 : vector<1x8x8xf32> to vector<1x8x8xbf16>
    %152 = vector.extract_strided_slice %95 {offsets = [0, 0, 56], sizes = [1, 8, 8], strides = [1, 1, 1]} : vector<1x8x128xf32> to vector<1x8x8xf32>
    %153 = arith.truncf %152 : vector<1x8x8xf32> to vector<1x8x8xbf16>
    %154 = vector.extract_strided_slice %95 {offsets = [0, 0, 88], sizes = [1, 8, 8], strides = [1, 1, 1]} : vector<1x8x128xf32> to vector<1x8x8xf32>
    %155 = arith.truncf %154 : vector<1x8x8xf32> to vector<1x8x8xbf16>
    %cst_67 = arith.constant dense<0.000000e+00> : vector<1x8x8xf32>
    %156 = tpu.matmul %151, %153, %cst_67 {dimension_numbers = #tpu.dot_dimension_numbers<[2], [2], [1], [1], [0, 0, 0, 1, 1, 1], [0], [0]>} : vector<1x8x8xbf16>, vector<1x8x8xbf16>, vector<1x8x8xf32> -> vector<1x8x8xf32>
    %cst_68 = arith.constant 0.353553385 : f32
    %157 = vector.broadcast %cst_68 : f32 to vector<1x8x8xf32>
    %158 = arith.mulf %156, %157 : vector<1x8x8xf32>
    %159 = arith.addf %158, %86 : vector<1x8x8xf32>
    %160 = math.exp %159 : vector<1x8x8xf32>
    %cst_69 = arith.constant dense<0.000000e+00> : vector<1x8xf32>
    %161 = vector.multi_reduction <add>, %160, %cst_69 [2] : vector<1x8x8xf32> to vector<1x8xf32>
    %162 = vector.shape_cast %161 : vector<1x8xf32> to vector<1x8x1xf32>
    %163 = tpu.reciprocal %162 {approx = true} : vector<1x8x1xf32> -> vector<1x8x1xf32>
    %164 = vector.broadcast %163 : vector<1x8x1xf32> to vector<1x8x8xf32>
    %165 = arith.mulf %160, %164 : vector<1x8x8xf32>
    %166 = arith.truncf %165 : vector<1x8x8xf32> to vector<1x8x8xbf16>
    %cst_70 = arith.constant dense<0.000000e+00> : vector<1x8x8xf32>
    %167 = tpu.matmul %166, %155, %cst_70 {dimension_numbers = #tpu.dot_dimension_numbers<[2], [1], [1], [2], [0, 0, 0, 1, 1, 2], [0], [0]>} : vector<1x8x8xbf16>, vector<1x8x8xbf16>, vector<1x8x8xf32> -> vector<1x8x8xf32>
    %168 = tpu.concatenate %113, %131, %149, %167 in 2 : vector<1x8x8xf32>, vector<1x8x8xf32>, vector<1x8x8xf32>, vector<1x8x8xf32> -> vector<1x8x32xf32>
    %169 = vector.shape_cast %168 : vector<1x8x32xf32> to vector<8x32xf32>
    %170 = arith.truncf %169 : vector<8x32xf32> to vector<8x32xbf16>
    %c0_71 = arith.constant 0 : index
    %c0_72 = arith.constant 0 : index
    %c0_73 = arith.constant 0 : index
    %171 = vector.load %arg9[%c0_71, %c0_72, %c0_73] : memref<2x32x32xbf16, #tpu.memory_space<vmem>>, vector<1x32x32xbf16>
    %172 = vector.shape_cast %171 : vector<1x32x32xbf16> to vector<32x32xbf16>
    %cst_74 = arith.constant dense<0.000000e+00> : vector<8x32xf32>
    %173 = tpu.matmul %170, %172, %cst_74 {dimension_numbers = #tpu.dot_dimension_numbers<[1], [0], [0], [1], [0, 0, 1, 1], [], []>} : vector<8x32xbf16>, vector<32x32xbf16>, vector<8x32xf32> -> vector<8x32xf32>
    %c0_75 = arith.constant 0 : index
    %c0_76 = arith.constant 0 : index
    %c0_77 = arith.constant 0 : index
    %174 = vector.load %arg10[%c0_75, %c0_76, %c0_77] : memref<2x1x32xf32, #tpu.memory_space<vmem>>, vector<1x1x32xf32>
    %175 = vector.shape_cast %174 : vector<1x1x32xf32> to vector<1x32xf32>
    %176 = vector.broadcast %175 : vector<1x32xf32> to vector<8x32xf32>
    %177 = arith.addf %173, %176 : vector<8x32xf32>
    %178 = arith.addf %76, %177 : vector<8x32xf32>
    %c0_78 = arith.constant 0 : index
    %c0_79 = arith.constant 0 : index
    %c0_80 = arith.constant 0 : index
    %179 = vector.load %arg11[%c0_78, %c0_79, %c0_80] : memref<2x1x32xf32, #tpu.memory_space<vmem>>, vector<1x1x32xf32>
    %180 = vector.shape_cast %179 : vector<1x1x32xf32> to vector<1x32xf32>
    %c0_81 = arith.constant 0 : index
    %c0_82 = arith.constant 0 : index
    %c0_83 = arith.constant 0 : index
    %181 = vector.load %arg12[%c0_81, %c0_82, %c0_83] : memref<2x1x32xf32, #tpu.memory_space<vmem>>, vector<1x1x32xf32>
    %182 = vector.shape_cast %181 : vector<1x1x32xf32> to vector<1x32xf32>
    %cst_84 = arith.constant dense<0.000000e+00> : vector<8xf32>
    %183 = vector.multi_reduction <add>, %178, %cst_84 [1] : vector<8x32xf32> to vector<8xf32>
    %184 = vector.shape_cast %183 : vector<8xf32> to vector<8x1xf32>
    %cst_85 = arith.constant 3.200000e+01 : f32
    %185 = vector.broadcast %cst_85 : f32 to vector<8x1xf32>
    %186 = arith.divf %184, %185 : vector<8x1xf32>
    %187 = vector.broadcast %186 : vector<8x1xf32> to vector<8x32xf32>
    %188 = arith.subf %178, %187 : vector<8x32xf32>
    %189 = arith.mulf %188, %188 : vector<8x32xf32>
    %cst_86 = arith.constant dense<0.000000e+00> : vector<8xf32>
    %190 = vector.multi_reduction <add>, %189, %cst_86 [1] : vector<8x32xf32> to vector<8xf32>
    %191 = vector.shape_cast %190 : vector<8xf32> to vector<8x1xf32>
    %cst_87 = arith.constant 3.200000e+01 : f32
    %192 = vector.broadcast %cst_87 : f32 to vector<8x1xf32>
    %193 = arith.divf %191, %192 : vector<8x1xf32>
    %cst_88 = arith.constant 9.99999996E-13 : f32
    %194 = vector.broadcast %cst_88 : f32 to vector<8x1xf32>
    %195 = arith.addf %193, %194 : vector<8x1xf32>
    %196 = math.rsqrt %195 : vector<8x1xf32>
    %197 = vector.broadcast %196 : vector<8x1xf32> to vector<8x32xf32>
    %198 = arith.mulf %188, %197 : vector<8x32xf32>
    %199 = vector.broadcast %180 : vector<1x32xf32> to vector<8x32xf32>
    %200 = arith.mulf %198, %199 : vector<8x32xf32>
    %201 = vector.broadcast %182 : vector<1x32xf32> to vector<8x32xf32>
    %202 = arith.addf %200, %201 : vector<8x32xf32>
    %203 = arith.truncf %202 : vector<8x32xf32> to vector<8x32xbf16>
    %c0_89 = arith.constant 0 : index
    %c0_90 = arith.constant 0 : index
    %c0_91 = arith.constant 0 : index
    %204 = vector.load %arg13[%c0_89, %c0_90, %c0_91] : memref<2x32x128xbf16, #tpu.memory_space<vmem>>, vector<1x32x128xbf16>
    %205 = vector.shape_cast %204 : vector<1x32x128xbf16> to vector<32x128xbf16>
    %cst_92 = arith.constant dense<0.000000e+00> : vector<8x128xf32>
    %206 = tpu.matmul %203, %205, %cst_92 {dimension_numbers = #tpu.dot_dimension_numbers<[1], [0], [0], [1], [0, 0, 1, 1], [], []>} : vector<8x32xbf16>, vector<32x128xbf16>, vector<8x128xf32> -> vector<8x128xf32>
    %c0_93 = arith.constant 0 : index
    %c0_94 = arith.constant 0 : index
    %c0_95 = arith.constant 0 : index
    %207 = vector.load %arg14[%c0_93, %c0_94, %c0_95] : memref<2x1x128xf32, #tpu.memory_space<vmem>>, vector<1x1x128xf32>
    %208 = vector.shape_cast %207 : vector<1x1x128xf32> to vector<1x128xf32>
    %209 = vector.broadcast %208 : vector<1x128xf32> to vector<8x128xf32>
    %210 = arith.addf %206, %209 : vector<8x128xf32>
    %cst_96 = arith.constant 5.000000e-01 : f32
    %211 = vector.broadcast %cst_96 : f32 to vector<8x128xf32>
    %212 = arith.mulf %211, %210 : vector<8x128xf32>
    %cst_97 = arith.constant 4.471500e-02 : f32
    %213 = vector.broadcast %cst_97 : f32 to vector<8x128xf32>
    %214 = arith.mulf %213, %210 : vector<8x128xf32>
    %215 = arith.mulf %214, %210 : vector<8x128xf32>
    %216 = arith.mulf %215, %210 : vector<8x128xf32>
    %217 = arith.addf %210, %216 : vector<8x128xf32>
    %cst_98 = arith.constant 0.797884583 : f32
    %218 = vector.broadcast %cst_98 : f32 to vector<8x128xf32>
    %219 = arith.mulf %218, %217 : vector<8x128xf32>
    %220 = math.tanh %219 : vector<8x128xf32>
    %cst_99 = arith.constant 1.000000e+00 : f32
    %221 = vector.broadcast %cst_99 : f32 to vector<8x128xf32>
    %222 = arith.addf %221, %220 : vector<8x128xf32>
    %223 = arith.mulf %212, %222 : vector<8x128xf32>
    %224 = arith.truncf %223 : vector<8x128xf32> to vector<8x128xbf16>
    %c0_100 = arith.constant 0 : index
    %c0_101 = arith.constant 0 : index
    %c0_102 = arith.constant 0 : index
    %225 = vector.load %arg15[%c0_100, %c0_101, %c0_102] : memref<2x128x32xbf16, #tpu.memory_space<vmem>>, vector<1x128x32xbf16>
    %226 = vector.shape_cast %225 : vector<1x128x32xbf16> to vector<128x32xbf16>
    %cst_103 = arith.constant dense<0.000000e+00> : vector<8x32xf32>
    %227 = tpu.matmul %224, %226, %cst_103 {dimension_numbers = #tpu.dot_dimension_numbers<[1], [0], [0], [1], [0, 0, 1, 1], [], []>} : vector<8x128xbf16>, vector<128x32xbf16>, vector<8x32xf32> -> vector<8x32xf32>
    %c0_104 = arith.constant 0 : index
    %c0_105 = arith.constant 0 : index
    %c0_106 = arith.constant 0 : index
    %228 = vector.load %arg16[%c0_104, %c0_105, %c0_106] : memref<2x1x32xf32, #tpu.memory_space<vmem>>, vector<1x1x32xf32>
    %229 = vector.shape_cast %228 : vector<1x1x32xf32> to vector<1x32xf32>
    %230 = vector.broadcast %229 : vector<1x32xf32> to vector<8x32xf32>
    %231 = arith.addf %227, %230 : vector<8x32xf32>
    %232 = arith.addf %202, %231 : vector<8x32xf32>
    %c0_107 = arith.constant 0 : index
    %c0_108 = arith.constant 0 : index
    %c0_109 = arith.constant 0 : index
    %233 = vector.load %arg17[%c0_107, %c0_108, %c0_109] : memref<2x1x32xf32, #tpu.memory_space<vmem>>, vector<1x1x32xf32>
    %234 = vector.shape_cast %233 : vector<1x1x32xf32> to vector<1x32xf32>
    %c0_110 = arith.constant 0 : index
    %c0_111 = arith.constant 0 : index
    %c0_112 = arith.constant 0 : index
    %235 = vector.load %arg18[%c0_110, %c0_111, %c0_112] : memref<2x1x32xf32, #tpu.memory_space<vmem>>, vector<1x1x32xf32>
    %236 = vector.shape_cast %235 : vector<1x1x32xf32> to vector<1x32xf32>
    %cst_113 = arith.constant dense<0.000000e+00> : vector<8xf32>
    %237 = vector.multi_reduction <add>, %232, %cst_113 [1] : vector<8x32xf32> to vector<8xf32>
    %238 = vector.shape_cast %237 : vector<8xf32> to vector<8x1xf32>
    %cst_114 = arith.constant 3.200000e+01 : f32
    %239 = vector.broadcast %cst_114 : f32 to vector<8x1xf32>
    %240 = arith.divf %238, %239 : vector<8x1xf32>
    %241 = vector.broadcast %240 : vector<8x1xf32> to vector<8x32xf32>
    %242 = arith.subf %232, %241 : vector<8x32xf32>
    %243 = arith.mulf %242, %242 : vector<8x32xf32>
    %cst_115 = arith.constant dense<0.000000e+00> : vector<8xf32>
    %244 = vector.multi_reduction <add>, %243, %cst_115 [1] : vector<8x32xf32> to vector<8xf32>
    %245 = vector.shape_cast %244 : vector<8xf32> to vector<8x1xf32>
    %cst_116 = arith.constant 3.200000e+01 : f32
    %246 = vector.broadcast %cst_116 : f32 to vector<8x1xf32>
    %247 = arith.divf %245, %246 : vector<8x1xf32>
    %cst_117 = arith.constant 9.99999996E-13 : f32
    %248 = vector.broadcast %cst_117 : f32 to vector<8x1xf32>
    %249 = arith.addf %247, %248 : vector<8x1xf32>
    %250 = math.rsqrt %249 : vector<8x1xf32>
    %251 = vector.broadcast %250 : vector<8x1xf32> to vector<8x32xf32>
    %252 = arith.mulf %242, %251 : vector<8x32xf32>
    %253 = vector.broadcast %234 : vector<1x32xf32> to vector<8x32xf32>
    %254 = arith.mulf %252, %253 : vector<8x32xf32>
    %255 = vector.broadcast %236 : vector<1x32xf32> to vector<8x32xf32>
    %256 = arith.addf %254, %255 : vector<8x32xf32>
    %257 = arith.truncf %256 : vector<8x32xf32> to vector<8x32xbf16>
    %c1_118 = arith.constant 1 : index
    %c0_119 = arith.constant 0 : index
    %c0_120 = arith.constant 0 : index
    %258 = vector.load %arg7[%c1_118, %c0_119, %c0_120] : memref<2x32x128xbf16, #tpu.memory_space<vmem>>, vector<1x32x128xbf16>
    %259 = vector.shape_cast %258 : vector<1x32x128xbf16> to vector<32x128xbf16>
    %cst_121 = arith.constant dense<0.000000e+00> : vector<8x128xf32>
    %260 = tpu.matmul %257, %259, %cst_121 {dimension_numbers = #tpu.dot_dimension_numbers<[1], [0], [0], [1], [0, 0, 1, 1], [], []>} : vector<8x32xbf16>, vector<32x128xbf16>, vector<8x128xf32> -> vector<8x128xf32>
    %c1_122 = arith.constant 1 : index
    %c0_123 = arith.constant 0 : index
    %c0_124 = arith.constant 0 : index
    %261 = vector.load %arg8[%c1_122, %c0_123, %c0_124] : memref<2x1x128xf32, #tpu.memory_space<vmem>>, vector<1x1x128xf32>
    %262 = vector.shape_cast %261 : vector<1x1x128xf32> to vector<1x128xf32>
    %263 = vector.broadcast %262 : vector<1x128xf32> to vector<8x128xf32>
    %264 = arith.addf %260, %263 : vector<8x128xf32>
    %265 = vector.shape_cast %264 : vector<8x128xf32> to vector<1x8x128xf32>
    %266 = vector.extract_strided_slice %265 {offsets = [0, 0, 0], sizes = [1, 8, 8], strides = [1, 1, 1]} : vector<1x8x128xf32> to vector<1x8x8xf32>
    %267 = arith.truncf %266 : vector<1x8x8xf32> to vector<1x8x8xbf16>
    %268 = vector.extract_strided_slice %265 {offsets = [0, 0, 32], sizes = [1, 8, 8], strides = [1, 1, 1]} : vector<1x8x128xf32> to vector<1x8x8xf32>
    %269 = arith.truncf %268 : vector<1x8x8xf32> to vector<1x8x8xbf16>
    %270 = vector.extract_strided_slice %265 {offsets = [0, 0, 64], sizes = [1, 8, 8], strides = [1, 1, 1]} : vector<1x8x128xf32> to vector<1x8x8xf32>
    %271 = arith.truncf %270 : vector<1x8x8xf32> to vector<1x8x8xbf16>
    %cst_125 = arith.constant dense<0.000000e+00> : vector<1x8x8xf32>
    %272 = tpu.matmul %267, %269, %cst_125 {dimension_numbers = #tpu.dot_dimension_numbers<[2], [2], [1], [1], [0, 0, 0, 1, 1, 1], [0], [0]>} : vector<1x8x8xbf16>, vector<1x8x8xbf16>, vector<1x8x8xf32> -> vector<1x8x8xf32>
    %cst_126 = arith.constant 0.353553385 : f32
    %273 = vector.broadcast %cst_126 : f32 to vector<1x8x8xf32>
    %274 = arith.mulf %272, %273 : vector<1x8x8xf32>
    %275 = arith.addf %274, %86 : vector<1x8x8xf32>
    %276 = math.exp %275 : vector<1x8x8xf32>
    %cst_127 = arith.constant dense<0.000000e+00> : vector<1x8xf32>
    %277 = vector.multi_reduction <add>, %276, %cst_127 [2] : vector<1x8x8xf32> to vector<1x8xf32>
    %278 = vector.shape_cast %277 : vector<1x8xf32> to vector<1x8x1xf32>
    %279 = tpu.reciprocal %278 {approx = true} : vector<1x8x1xf32> -> vector<1x8x1xf32>
    %280 = vector.broadcast %279 : vector<1x8x1xf32> to vector<1x8x8xf32>
    %281 = arith.mulf %276, %280 : vector<1x8x8xf32>
    %282 = arith.truncf %281 : vector<1x8x8xf32> to vector<1x8x8xbf16>
    %cst_128 = arith.constant dense<0.000000e+00> : vector<1x8x8xf32>
    %283 = tpu.matmul %282, %271, %cst_128 {dimension_numbers = #tpu.dot_dimension_numbers<[2], [1], [1], [2], [0, 0, 0, 1, 1, 2], [0], [0]>} : vector<1x8x8xbf16>, vector<1x8x8xbf16>, vector<1x8x8xf32> -> vector<1x8x8xf32>
    %284 = vector.extract_strided_slice %265 {offsets = [0, 0, 8], sizes = [1, 8, 8], strides = [1, 1, 1]} : vector<1x8x128xf32> to vector<1x8x8xf32>
    %285 = arith.truncf %284 : vector<1x8x8xf32> to vector<1x8x8xbf16>
    %286 = vector.extract_strided_slice %265 {offsets = [0, 0, 40], sizes = [1, 8, 8], strides = [1, 1, 1]} : vector<1x8x128xf32> to vector<1x8x8xf32>
    %287 = arith.truncf %286 : vector<1x8x8xf32> to vector<1x8x8xbf16>
    %288 = vector.extract_strided_slice %265 {offsets = [0, 0, 72], sizes = [1, 8, 8], strides = [1, 1, 1]} : vector<1x8x128xf32> to vector<1x8x8xf32>
    %289 = arith.truncf %288 : vector<1x8x8xf32> to vector<1x8x8xbf16>
    %cst_129 = arith.constant dense<0.000000e+00> : vector<1x8x8xf32>
    %290 = tpu.matmul %285, %287, %cst_129 {dimension_numbers = #tpu.dot_dimension_numbers<[2], [2], [1], [1], [0, 0, 0, 1, 1, 1], [0], [0]>} : vector<1x8x8xbf16>, vector<1x8x8xbf16>, vector<1x8x8xf32> -> vector<1x8x8xf32>
    %cst_130 = arith.constant 0.353553385 : f32
    %291 = vector.broadcast %cst_130 : f32 to vector<1x8x8xf32>
    %292 = arith.mulf %290, %291 : vector<1x8x8xf32>
    %293 = arith.addf %292, %86 : vector<1x8x8xf32>
    %294 = math.exp %293 : vector<1x8x8xf32>
    %cst_131 = arith.constant dense<0.000000e+00> : vector<1x8xf32>
    %295 = vector.multi_reduction <add>, %294, %cst_131 [2] : vector<1x8x8xf32> to vector<1x8xf32>
    %296 = vector.shape_cast %295 : vector<1x8xf32> to vector<1x8x1xf32>
    %297 = tpu.reciprocal %296 {approx = true} : vector<1x8x1xf32> -> vector<1x8x1xf32>
    %298 = vector.broadcast %297 : vector<1x8x1xf32> to vector<1x8x8xf32>
    %299 = arith.mulf %294, %298 : vector<1x8x8xf32>
    %300 = arith.truncf %299 : vector<1x8x8xf32> to vector<1x8x8xbf16>
    %cst_132 = arith.constant dense<0.000000e+00> : vector<1x8x8xf32>
    %301 = tpu.matmul %300, %289, %cst_132 {dimension_numbers = #tpu.dot_dimension_numbers<[2], [1], [1], [2], [0, 0, 0, 1, 1, 2], [0], [0]>} : vector<1x8x8xbf16>, vector<1x8x8xbf16>, vector<1x8x8xf32> -> vector<1x8x8xf32>
    %302 = vector.extract_strided_slice %265 {offsets = [0, 0, 16], sizes = [1, 8, 8], strides = [1, 1, 1]} : vector<1x8x128xf32> to vector<1x8x8xf32>
    %303 = arith.truncf %302 : vector<1x8x8xf32> to vector<1x8x8xbf16>
    %304 = vector.extract_strided_slice %265 {offsets = [0, 0, 48], sizes = [1, 8, 8], strides = [1, 1, 1]} : vector<1x8x128xf32> to vector<1x8x8xf32>
    %305 = arith.truncf %304 : vector<1x8x8xf32> to vector<1x8x8xbf16>
    %306 = vector.extract_strided_slice %265 {offsets = [0, 0, 80], sizes = [1, 8, 8], strides = [1, 1, 1]} : vector<1x8x128xf32> to vector<1x8x8xf32>
    %307 = arith.truncf %306 : vector<1x8x8xf32> to vector<1x8x8xbf16>
    %cst_133 = arith.constant dense<0.000000e+00> : vector<1x8x8xf32>
    %308 = tpu.matmul %303, %305, %cst_133 {dimension_numbers = #tpu.dot_dimension_numbers<[2], [2], [1], [1], [0, 0, 0, 1, 1, 1], [0], [0]>} : vector<1x8x8xbf16>, vector<1x8x8xbf16>, vector<1x8x8xf32> -> vector<1x8x8xf32>
    %cst_134 = arith.constant 0.353553385 : f32
    %309 = vector.broadcast %cst_134 : f32 to vector<1x8x8xf32>
    %310 = arith.mulf %308, %309 : vector<1x8x8xf32>
    %311 = arith.addf %310, %86 : vector<1x8x8xf32>
    %312 = math.exp %311 : vector<1x8x8xf32>
    %cst_135 = arith.constant dense<0.000000e+00> : vector<1x8xf32>
    %313 = vector.multi_reduction <add>, %312, %cst_135 [2] : vector<1x8x8xf32> to vector<1x8xf32>
    %314 = vector.shape_cast %313 : vector<1x8xf32> to vector<1x8x1xf32>
    %315 = tpu.reciprocal %314 {approx = true} : vector<1x8x1xf32> -> vector<1x8x1xf32>
    %316 = vector.broadcast %315 : vector<1x8x1xf32> to vector<1x8x8xf32>
    %317 = arith.mulf %312, %316 : vector<1x8x8xf32>
    %318 = arith.truncf %317 : vector<1x8x8xf32> to vector<1x8x8xbf16>
    %cst_136 = arith.constant dense<0.000000e+00> : vector<1x8x8xf32>
    %319 = tpu.matmul %318, %307, %cst_136 {dimension_numbers = #tpu.dot_dimension_numbers<[2], [1], [1], [2], [0, 0, 0, 1, 1, 2], [0], [0]>} : vector<1x8x8xbf16>, vector<1x8x8xbf16>, vector<1x8x8xf32> -> vector<1x8x8xf32>
    %320 = vector.extract_strided_slice %265 {offsets = [0, 0, 24], sizes = [1, 8, 8], strides = [1, 1, 1]} : vector<1x8x128xf32> to vector<1x8x8xf32>
    %321 = arith.truncf %320 : vector<1x8x8xf32> to vector<1x8x8xbf16>
    %322 = vector.extract_strided_slice %265 {offsets = [0, 0, 56], sizes = [1, 8, 8], strides = [1, 1, 1]} : vector<1x8x128xf32> to vector<1x8x8xf32>
    %323 = arith.truncf %322 : vector<1x8x8xf32> to vector<1x8x8xbf16>
    %324 = vector.extract_strided_slice %265 {offsets = [0, 0, 88], sizes = [1, 8, 8], strides = [1, 1, 1]} : vector<1x8x128xf32> to vector<1x8x8xf32>
    %325 = arith.truncf %324 : vector<1x8x8xf32> to vector<1x8x8xbf16>
    %cst_137 = arith.constant dense<0.000000e+00> : vector<1x8x8xf32>
    %326 = tpu.matmul %321, %323, %cst_137 {dimension_numbers = #tpu.dot_dimension_numbers<[2], [2], [1], [1], [0, 0, 0, 1, 1, 1], [0], [0]>} : vector<1x8x8xbf16>, vector<1x8x8xbf16>, vector<1x8x8xf32> -> vector<1x8x8xf32>
    %cst_138 = arith.constant 0.353553385 : f32
    %327 = vector.broadcast %cst_138 : f32 to vector<1x8x8xf32>
    %328 = arith.mulf %326, %327 : vector<1x8x8xf32>
    %329 = arith.addf %328, %86 : vector<1x8x8xf32>
    %330 = math.exp %329 : vector<1x8x8xf32>
    %cst_139 = arith.constant dense<0.000000e+00> : vector<1x8xf32>
    %331 = vector.multi_reduction <add>, %330, %cst_139 [2] : vector<1x8x8xf32> to vector<1x8xf32>
    %332 = vector.shape_cast %331 : vector<1x8xf32> to vector<1x8x1xf32>
    %333 = tpu.reciprocal %332 {approx = true} : vector<1x8x1xf32> -> vector<1x8x1xf32>
    %334 = vector.broadcast %333 : vector<1x8x1xf32> to vector<1x8x8xf32>
    %335 = arith.mulf %330, %334 : vector<1x8x8xf32>
    %336 = arith.truncf %335 : vector<1x8x8xf32> to vector<1x8x8xbf16>
    %cst_140 = arith.constant dense<0.000000e+00> : vector<1x8x8xf32>
    %337 = tpu.matmul %336, %325, %cst_140 {dimension_numbers = #tpu.dot_dimension_numbers<[2], [1], [1], [2], [0, 0, 0, 1, 1, 2], [0], [0]>} : vector<1x8x8xbf16>, vector<1x8x8xbf16>, vector<1x8x8xf32> -> vector<1x8x8xf32>
    %338 = tpu.concatenate %283, %301, %319, %337 in 2 : vector<1x8x8xf32>, vector<1x8x8xf32>, vector<1x8x8xf32>, vector<1x8x8xf32> -> vector<1x8x32xf32>
    %339 = vector.shape_cast %338 : vector<1x8x32xf32> to vector<8x32xf32>
    %340 = arith.truncf %339 : vector<8x32xf32> to vector<8x32xbf16>
    %c1_141 = arith.constant 1 : index
    %c0_142 = arith.constant 0 : index
    %c0_143 = arith.constant 0 : index
    %341 = vector.load %arg9[%c1_141, %c0_142, %c0_143] : memref<2x32x32xbf16, #tpu.memory_space<vmem>>, vector<1x32x32xbf16>
    %342 = vector.shape_cast %341 : vector<1x32x32xbf16> to vector<32x32xbf16>
    %cst_144 = arith.constant dense<0.000000e+00> : vector<8x32xf32>
    %343 = tpu.matmul %340, %342, %cst_144 {dimension_numbers = #tpu.dot_dimension_numbers<[1], [0], [0], [1], [0, 0, 1, 1], [], []>} : vector<8x32xbf16>, vector<32x32xbf16>, vector<8x32xf32> -> vector<8x32xf32>
    %c1_145 = arith.constant 1 : index
    %c0_146 = arith.constant 0 : index
    %c0_147 = arith.constant 0 : index
    %344 = vector.load %arg10[%c1_145, %c0_146, %c0_147] : memref<2x1x32xf32, #tpu.memory_space<vmem>>, vector<1x1x32xf32>
    %345 = vector.shape_cast %344 : vector<1x1x32xf32> to vector<1x32xf32>
    %346 = vector.broadcast %345 : vector<1x32xf32> to vector<8x32xf32>
    %347 = arith.addf %343, %346 : vector<8x32xf32>
    %348 = arith.addf %256, %347 : vector<8x32xf32>
    %c1_148 = arith.constant 1 : index
    %c0_149 = arith.constant 0 : index
    %c0_150 = arith.constant 0 : index
    %349 = vector.load %arg11[%c1_148, %c0_149, %c0_150] : memref<2x1x32xf32, #tpu.memory_space<vmem>>, vector<1x1x32xf32>
    %350 = vector.shape_cast %349 : vector<1x1x32xf32> to vector<1x32xf32>
    %c1_151 = arith.constant 1 : index
    %c0_152 = arith.constant 0 : index
    %c0_153 = arith.constant 0 : index
    %351 = vector.load %arg12[%c1_151, %c0_152, %c0_153] : memref<2x1x32xf32, #tpu.memory_space<vmem>>, vector<1x1x32xf32>
    %352 = vector.shape_cast %351 : vector<1x1x32xf32> to vector<1x32xf32>
    %cst_154 = arith.constant dense<0.000000e+00> : vector<8xf32>
    %353 = vector.multi_reduction <add>, %348, %cst_154 [1] : vector<8x32xf32> to vector<8xf32>
    %354 = vector.shape_cast %353 : vector<8xf32> to vector<8x1xf32>
    %cst_155 = arith.constant 3.200000e+01 : f32
    %355 = vector.broadcast %cst_155 : f32 to vector<8x1xf32>
    %356 = arith.divf %354, %355 : vector<8x1xf32>
    %357 = vector.broadcast %356 : vector<8x1xf32> to vector<8x32xf32>
    %358 = arith.subf %348, %357 : vector<8x32xf32>
    %359 = arith.mulf %358, %358 : vector<8x32xf32>
    %cst_156 = arith.constant dense<0.000000e+00> : vector<8xf32>
    %360 = vector.multi_reduction <add>, %359, %cst_156 [1] : vector<8x32xf32> to vector<8xf32>
    %361 = vector.shape_cast %360 : vector<8xf32> to vector<8x1xf32>
    %cst_157 = arith.constant 3.200000e+01 : f32
    %362 = vector.broadcast %cst_157 : f32 to vector<8x1xf32>
    %363 = arith.divf %361, %362 : vector<8x1xf32>
    %cst_158 = arith.constant 9.99999996E-13 : f32
    %364 = vector.broadcast %cst_158 : f32 to vector<8x1xf32>
    %365 = arith.addf %363, %364 : vector<8x1xf32>
    %366 = math.rsqrt %365 : vector<8x1xf32>
    %367 = vector.broadcast %366 : vector<8x1xf32> to vector<8x32xf32>
    %368 = arith.mulf %358, %367 : vector<8x32xf32>
    %369 = vector.broadcast %350 : vector<1x32xf32> to vector<8x32xf32>
    %370 = arith.mulf %368, %369 : vector<8x32xf32>
    %371 = vector.broadcast %352 : vector<1x32xf32> to vector<8x32xf32>
    %372 = arith.addf %370, %371 : vector<8x32xf32>
    %373 = arith.truncf %372 : vector<8x32xf32> to vector<8x32xbf16>
    %c1_159 = arith.constant 1 : index
    %c0_160 = arith.constant 0 : index
    %c0_161 = arith.constant 0 : index
    %374 = vector.load %arg13[%c1_159, %c0_160, %c0_161] : memref<2x32x128xbf16, #tpu.memory_space<vmem>>, vector<1x32x128xbf16>
    %375 = vector.shape_cast %374 : vector<1x32x128xbf16> to vector<32x128xbf16>
    %cst_162 = arith.constant dense<0.000000e+00> : vector<8x128xf32>
    %376 = tpu.matmul %373, %375, %cst_162 {dimension_numbers = #tpu.dot_dimension_numbers<[1], [0], [0], [1], [0, 0, 1, 1], [], []>} : vector<8x32xbf16>, vector<32x128xbf16>, vector<8x128xf32> -> vector<8x128xf32>
    %c1_163 = arith.constant 1 : index
    %c0_164 = arith.constant 0 : index
    %c0_165 = arith.constant 0 : index
    %377 = vector.load %arg14[%c1_163, %c0_164, %c0_165] : memref<2x1x128xf32, #tpu.memory_space<vmem>>, vector<1x1x128xf32>
    %378 = vector.shape_cast %377 : vector<1x1x128xf32> to vector<1x128xf32>
    %379 = vector.broadcast %378 : vector<1x128xf32> to vector<8x128xf32>
    %380 = arith.addf %376, %379 : vector<8x128xf32>
    %cst_166 = arith.constant 5.000000e-01 : f32
    %381 = vector.broadcast %cst_166 : f32 to vector<8x128xf32>
    %382 = arith.mulf %381, %380 : vector<8x128xf32>
    %cst_167 = arith.constant 4.471500e-02 : f32
    %383 = vector.broadcast %cst_167 : f32 to vector<8x128xf32>
    %384 = arith.mulf %383, %380 : vector<8x128xf32>
    %385 = arith.mulf %384, %380 : vector<8x128xf32>
    %386 = arith.mulf %385, %380 : vector<8x128xf32>
    %387 = arith.addf %380, %386 : vector<8x128xf32>
    %cst_168 = arith.constant 0.797884583 : f32
    %388 = vector.broadcast %cst_168 : f32 to vector<8x128xf32>
    %389 = arith.mulf %388, %387 : vector<8x128xf32>
    %390 = math.tanh %389 : vector<8x128xf32>
    %cst_169 = arith.constant 1.000000e+00 : f32
    %391 = vector.broadcast %cst_169 : f32 to vector<8x128xf32>
    %392 = arith.addf %391, %390 : vector<8x128xf32>
    %393 = arith.mulf %382, %392 : vector<8x128xf32>
    %394 = arith.truncf %393 : vector<8x128xf32> to vector<8x128xbf16>
    %c1_170 = arith.constant 1 : index
    %c0_171 = arith.constant 0 : index
    %c0_172 = arith.constant 0 : index
    %395 = vector.load %arg15[%c1_170, %c0_171, %c0_172] : memref<2x128x32xbf16, #tpu.memory_space<vmem>>, vector<1x128x32xbf16>
    %396 = vector.shape_cast %395 : vector<1x128x32xbf16> to vector<128x32xbf16>
    %cst_173 = arith.constant dense<0.000000e+00> : vector<8x32xf32>
    %397 = tpu.matmul %394, %396, %cst_173 {dimension_numbers = #tpu.dot_dimension_numbers<[1], [0], [0], [1], [0, 0, 1, 1], [], []>} : vector<8x128xbf16>, vector<128x32xbf16>, vector<8x32xf32> -> vector<8x32xf32>
    %c1_174 = arith.constant 1 : index
    %c0_175 = arith.constant 0 : index
    %c0_176 = arith.constant 0 : index
    %398 = vector.load %arg16[%c1_174, %c0_175, %c0_176] : memref<2x1x32xf32, #tpu.memory_space<vmem>>, vector<1x1x32xf32>
    %399 = vector.shape_cast %398 : vector<1x1x32xf32> to vector<1x32xf32>
    %400 = vector.broadcast %399 : vector<1x32xf32> to vector<8x32xf32>
    %401 = arith.addf %397, %400 : vector<8x32xf32>
    %402 = arith.addf %372, %401 : vector<8x32xf32>
    %c1_177 = arith.constant 1 : index
    %c0_178 = arith.constant 0 : index
    %c0_179 = arith.constant 0 : index
    %403 = vector.load %arg17[%c1_177, %c0_178, %c0_179] : memref<2x1x32xf32, #tpu.memory_space<vmem>>, vector<1x1x32xf32>
    %404 = vector.shape_cast %403 : vector<1x1x32xf32> to vector<1x32xf32>
    %c1_180 = arith.constant 1 : index
    %c0_181 = arith.constant 0 : index
    %c0_182 = arith.constant 0 : index
    %405 = vector.load %arg18[%c1_180, %c0_181, %c0_182] : memref<2x1x32xf32, #tpu.memory_space<vmem>>, vector<1x1x32xf32>
    %406 = vector.shape_cast %405 : vector<1x1x32xf32> to vector<1x32xf32>
    %cst_183 = arith.constant dense<0.000000e+00> : vector<8xf32>
    %407 = vector.multi_reduction <add>, %402, %cst_183 [1] : vector<8x32xf32> to vector<8xf32>
    %408 = vector.shape_cast %407 : vector<8xf32> to vector<8x1xf32>
    %cst_184 = arith.constant 3.200000e+01 : f32
    %409 = vector.broadcast %cst_184 : f32 to vector<8x1xf32>
    %410 = arith.divf %408, %409 : vector<8x1xf32>
    %411 = vector.broadcast %410 : vector<8x1xf32> to vector<8x32xf32>
    %412 = arith.subf %402, %411 : vector<8x32xf32>
    %413 = arith.mulf %412, %412 : vector<8x32xf32>
    %cst_185 = arith.constant dense<0.000000e+00> : vector<8xf32>
    %414 = vector.multi_reduction <add>, %413, %cst_185 [1] : vector<8x32xf32> to vector<8xf32>
    %415 = vector.shape_cast %414 : vector<8xf32> to vector<8x1xf32>
    %cst_186 = arith.constant 3.200000e+01 : f32
    %416 = vector.broadcast %cst_186 : f32 to vector<8x1xf32>
    %417 = arith.divf %415, %416 : vector<8x1xf32>
    %cst_187 = arith.constant 9.99999996E-13 : f32
    %418 = vector.broadcast %cst_187 : f32 to vector<8x1xf32>
    %419 = arith.addf %417, %418 : vector<8x1xf32>
    %420 = math.rsqrt %419 : vector<8x1xf32>
    %421 = vector.broadcast %420 : vector<8x1xf32> to vector<8x32xf32>
    %422 = arith.mulf %412, %421 : vector<8x32xf32>
    %423 = vector.broadcast %404 : vector<1x32xf32> to vector<8x32xf32>
    %424 = arith.mulf %422, %423 : vector<8x32xf32>
    %425 = vector.broadcast %406 : vector<1x32xf32> to vector<8x32xf32>
    %426 = arith.addf %424, %425 : vector<8x32xf32>
    %427 = vector.extract_strided_slice %426 {offsets = [0, 0], sizes = [1, 32], strides = [1, 1]} : vector<8x32xf32> to vector<1x32xf32>
    %c0_188 = arith.constant 0 : index
    %c0_189 = arith.constant 0 : index
    %428 = vector.load %arg19[%c0_188, %c0_189] : memref<32x32xf32, #tpu.memory_space<vmem>>, vector<32x32xf32>
    %cst_190 = arith.constant dense<0.000000e+00> : vector<1x32xf32>
    %429 = tpu.matmul %427, %428, %cst_190 {dimension_numbers = #tpu.dot_dimension_numbers<[1], [0], [0], [1], [0, 0, 1, 1], [], []>} : vector<1x32xf32>, vector<32x32xf32>, vector<1x32xf32> -> vector<1x32xf32>
    %c0_191 = arith.constant 0 : index
    %c0_192 = arith.constant 0 : index
    %430 = vector.load %arg20[%c0_191, %c0_192] : memref<1x32xf32, #tpu.memory_space<vmem>>, vector<1x32xf32>
    %431 = arith.addf %429, %430 : vector<1x32xf32>
    %432 = math.tanh %431 : vector<1x32xf32>
    %c0_193 = arith.constant 0 : index
    %c0_194 = arith.constant 0 : index
    %433 = vector.load %arg21[%c0_193, %c0_194] : memref<32x128xf32, #tpu.memory_space<vmem>>, vector<32x128xf32>
    %cst_195 = arith.constant dense<0.000000e+00> : vector<1x128xf32>
    %434 = tpu.matmul %432, %433, %cst_195 {dimension_numbers = #tpu.dot_dimension_numbers<[1], [0], [0], [1], [0, 0, 1, 1], [], []>} : vector<1x32xf32>, vector<32x128xf32>, vector<1x128xf32> -> vector<1x128xf32>
    %c0_196 = arith.constant 0 : index
    %c0_197 = arith.constant 0 : index
    %435 = vector.load %arg22[%c0_196, %c0_197] : memref<1x128xf32, #tpu.memory_space<vmem>>, vector<1x128xf32>
    %436 = arith.addf %434, %435 : vector<1x128xf32>
    %437 = vector.shape_cast %436 : vector<1x128xf32> to vector<1x1x128xf32>
    %c0_198 = arith.constant 0 : index
    %c0_199 = arith.constant 0 : index
    %c0_200 = arith.constant 0 : index
    %438 = vector.load %arg23[%c0_198, %c0_199, %c0_200] : memref<1x1x128xf32, #tpu.memory_space<vmem>>, vector<1x1x128xf32>
    tpu.vector_store %arg23[%c0_198, %c0_199, %c0_200], %437 {strides = array<i32>} : memref<1x1x128xf32, #tpu.memory_space<vmem>>, vector<1x1x128xf32>,
    return
  }
  func.func @transform_0(%arg0: i32, %arg1: memref<2x8xi32, #tpu.memory_space<smem>>) -> (i32, i32, i32) {
    %c0_i32 = arith.constant 0 : i32
    %c0_i32_0 = arith.constant 0 : i32
    %c0_i32_1 = arith.constant 0 : i32
    return %arg0, %c0_i32, %c0_i32_0 : i32, i32, i32
  }
  func.func @transform_1(%arg0: i32, %arg1: memref<2x8xi32, #tpu.memory_space<smem>>) -> (i32, i32) {
    %c0_i32 = arith.constant 0 : i32
    %c0_i32_0 = arith.constant 0 : i32
    %c0_i32_1 = arith.constant 0 : i32
    return %c0_i32, %c0_i32_0 : i32, i32
  }
  func.func @transform_2(%arg0: i32, %arg1: memref<2x8xi32, #tpu.memory_space<smem>>) -> (i32, i32) {
    %c0_i32 = arith.constant 0 : i32
    %c0_i32_0 = arith.constant 0 : i32
    %c0_i32_1 = arith.constant 0 : i32
    return %c0_i32, %c0_i32_0 : i32, i32
  }
  func.func @transform_3(%arg0: i32, %arg1: memref<2x8xi32, #tpu.memory_space<smem>>) -> (i32, i32) {
    %c0_i32 = arith.constant 0 : i32
    %c0_i32_0 = arith.constant 0 : i32
    %c0_i32_1 = arith.constant 0 : i32
    return %c0_i32, %c0_i32_0 : i32, i32
  }
  func.func @transform_4(%arg0: i32, %arg1: memref<2x8xi32, #tpu.memory_space<smem>>) -> (i32, i32) {
    %c0_i32 = arith.constant 0 : i32
    %c0_i32_0 = arith.constant 0 : i32
    %c0_i32_1 = arith.constant 0 : i32
    return %c0_i32, %c0_i32_0 : i32, i32
  }
  func.func @transform_5(%arg0: i32, %arg1: memref<2x8xi32, #tpu.memory_space<smem>>) -> (i32, i32, i32) {
    %c0_i32 = arith.constant 0 : i32
    %c0_i32_0 = arith.constant 0 : i32
    %c0_i32_1 = arith.constant 0 : i32
    %c0_i32_2 = arith.constant 0 : i32
    return %c0_i32, %c0_i32_0, %c0_i32_1 : i32, i32, i32
  }
  func.func @transform_6(%arg0: i32, %arg1: memref<2x8xi32, #tpu.memory_space<smem>>) -> (i32, i32, i32) {
    %c0_i32 = arith.constant 0 : i32
    %c0_i32_0 = arith.constant 0 : i32
    %c0_i32_1 = arith.constant 0 : i32
    %c0_i32_2 = arith.constant 0 : i32
    return %c0_i32, %c0_i32_0, %c0_i32_1 : i32, i32, i32
  }
  func.func @transform_7(%arg0: i32, %arg1: memref<2x8xi32, #tpu.memory_space<smem>>) -> (i32, i32, i32) {
    %c0_i32 = arith.constant 0 : i32
    %c0_i32_0 = arith.constant 0 : i32
    %c0_i32_1 = arith.constant 0 : i32
    %c0_i32_2 = arith.constant 0 : i32
    return %c0_i32, %c0_i32_0, %c0_i32_1 : i32, i32, i32
  }
  func.func @transform_8(%arg0: i32, %arg1: memref<2x8xi32, #tpu.memory_space<smem>>) -> (i32, i32, i32) {
    %c0_i32 = arith.constant 0 : i32
    %c0_i32_0 = arith.constant 0 : i32
    %c0_i32_1 = arith.constant 0 : i32
    %c0_i32_2 = arith.constant 0 : i32
    return %c0_i32, %c0_i32_0, %c0_i32_1 : i32, i32, i32
  }
  func.func @transform_9(%arg0: i32, %arg1: memref<2x8xi32, #tpu.memory_space<smem>>) -> (i32, i32, i32) {
    %c0_i32 = arith.constant 0 : i32
    %c0_i32_0 = arith.constant 0 : i32
    %c0_i32_1 = arith.constant 0 : i32
    %c0_i32_2 = arith.constant 0 : i32
    return %c0_i32, %c0_i32_0, %c0_i32_1 : i32, i32, i32
  }
  func.func @transform_10(%arg0: i32, %arg1: memref<2x8xi32, #tpu.memory_space<smem>>) -> (i32, i32, i32) {
    %c0_i32 = arith.constant 0 : i32
    %c0_i32_0 = arith.constant 0 : i32
    %c0_i32_1 = arith.constant 0 : i32
    %c0_i32_2 = arith.constant 0 : i32
    return %c0_i32, %c0_i32_0, %c0_i32_1 : i32, i32, i32
  }
  func.func @transform_11(%arg0: i32, %arg1: memref<2x8xi32, #tpu.memory_space<smem>>) -> (i32, i32, i32) {
    %c0_i32 = arith.constant 0 : i32
    %c0_i32_0 = arith.constant 0 : i32
    %c0_i32_1 = arith.constant 0 : i32
    %c0_i32_2 = arith.constant 0 : i32
    return %c0_i32, %c0_i32_0, %c0_i32_1 : i32, i32, i32
  }
  func.func @transform_12(%arg0: i32, %arg1: memref<2x8xi32, #tpu.memory_space<smem>>) -> (i32, i32, i32) {
    %c0_i32 = arith.constant 0 : i32
    %c0_i32_0 = arith.constant 0 : i32
    %c0_i32_1 = arith.constant 0 : i32
    %c0_i32_2 = arith.constant 0 : i32
    return %c0_i32, %c0_i32_0, %c0_i32_1 : i32, i32, i32
  }
  func.func @transform_13(%arg0: i32, %arg1: memref<2x8xi32, #tpu.memory_space<smem>>) -> (i32, i32, i32) {
    %c0_i32 = arith.constant 0 : i32
    %c0_i32_0 = arith.constant 0 : i32
    %c0_i32_1 = arith.constant 0 : i32
    %c0_i32_2 = arith.constant 0 : i32
    return %c0_i32, %c0_i32_0, %c0_i32_1 : i32, i32, i32
  }
  func.func @transform_14(%arg0: i32, %arg1: memref<2x8xi32, #tpu.memory_space<smem>>) -> (i32, i32, i32) {
    %c0_i32 = arith.constant 0 : i32
    %c0_i32_0 = arith.constant 0 : i32
    %c0_i32_1 = arith.constant 0 : i32
    %c0_i32_2 = arith.constant 0 : i32
    return %c0_i32, %c0_i32_0, %c0_i32_1 : i32, i32, i32
  }
  func.func @transform_15(%arg0: i32, %arg1: memref<2x8xi32, #tpu.memory_space<smem>>) -> (i32, i32, i32) {
    %c0_i32 = arith.constant 0 : i32
    %c0_i32_0 = arith.constant 0 : i32
    %c0_i32_1 = arith.constant 0 : i32
    %c0_i32_2 = arith.constant 0 : i32
    return %c0_i32, %c0_i32_0, %c0_i32_1 : i32, i32, i32
  }
  func.func @transform_16(%arg0: i32, %arg1: memref<2x8xi32, #tpu.memory_space<smem>>) -> (i32, i32, i32) {
    %c0_i32 = arith.constant 0 : i32
    %c0_i32_0 = arith.constant 0 : i32
    %c0_i32_1 = arith.constant 0 : i32
    %c0_i32_2 = arith.constant 0 : i32
    return %c0_i32, %c0_i32_0, %c0_i32_1 : i32, i32, i32
  }
  func.func @transform_17(%arg0: i32, %arg1: memref<2x8xi32, #tpu.memory_space<smem>>) -> (i32, i32) {
    %c0_i32 = arith.constant 0 : i32
    %c0_i32_0 = arith.constant 0 : i32
    %c0_i32_1 = arith.constant 0 : i32
    return %c0_i32, %c0_i32_0 : i32, i32
  }
  func.func @transform_18(%arg0: i32, %arg1: memref<2x8xi32, #tpu.memory_space<smem>>) -> (i32, i32) {
    %c0_i32 = arith.constant 0 : i32
    %c0_i32_0 = arith.constant 0 : i32
    %c0_i32_1 = arith.constant 0 : i32
    return %c0_i32, %c0_i32_0 : i32, i32
  }
  func.func @transform_19(%arg0: i32, %arg1: memref<2x8xi32, #tpu.memory_space<smem>>) -> (i32, i32) {
    %c0_i32 = arith.constant 0 : i32
    %c0_i32_0 = arith.constant 0 : i32
    %c0_i32_1 = arith.constant 0 : i32
    return %c0_i32, %c0_i32_0 : i32, i32
  }
  func.func @transform_20(%arg0: i32, %arg1: memref<2x8xi32, #tpu.memory_space<smem>>) -> (i32, i32) {
    %c0_i32 = arith.constant 0 : i32
    %c0_i32_0 = arith.constant 0 : i32
    %c0_i32_1 = arith.constant 0 : i32
    return %c0_i32, %c0_i32_0 : i32, i32
  }
  func.func @transform_21(%arg0: i32, %arg1: memref<2x8xi32, #tpu.memory_space<smem>>) -> (i32, i32, i32) {
    %c0_i32 = arith.constant 0 : i32
    %c0_i32_0 = arith.constant 0 : i32
    %c0_i32_1 = arith.constant 0 : i32
    return %arg0, %c0_i32, %c0_i32_0 : i32, i32, i32
  }
}

</mosaic_0001>

<llo_original>
// kernel: bert_classifier_forward.1
$region0: #{bert_classifier_forward.1}
  #allocation0 [shape = 'u32[]', space=smem, size = 0x4, offset = 0x4, fixed_abs, tag = 'smem constant byte address 0x4 - core index']
  #allocation1 [shape = 'u32[72,128]{1,0:T(1,128)}', space=vmem, size = 0x9000, scoped, tag = 'internal scratch']
  #allocation2 [shape = 'f32[8,32]{1,0:T(8,128)}', space=vmem, size = 0x1000, scoped, tag = 'scratch operand']
  #allocation3 [shape = 's32[1]{0}', space=sflag, size = 0x4, scoped, tag = 'scoped memory for bert_classifier_forward.1']
  #allocation4 [shape = 'u8[1024]{0}', space=smem, size = 0x400, scoped, tag = 'prefetched SMEM operand 0']
  %s0 = inlined_call_operand.vmem [shape: s32[2,8], index: 0, kind: input, shape index: {}]
  %s1 = inlined_call_operand.vmem [shape: s32[2,1,8], index: 1, kind: input, shape index: {}]
  %s2 = inlined_call_operand.vmem [shape: f32[100,32], index: 2, kind: input, shape index: {}]
  %s3 = inlined_call_operand.vmem [shape: f32[16,32], index: 3, kind: input, shape index: {}]
  %s4 = inlined_call_operand.vmem [shape: f32[1,32], index: 4, kind: input, shape index: {}]
  %s5 = inlined_call_operand.vmem [shape: f32[1,32], index: 5, kind: input, shape index: {}]
  %s6 = inlined_call_operand.vmem [shape: bf16[2,32,128], index: 6, kind: input, shape index: {}]
  %s7 = inlined_call_operand.vmem [shape: f32[2,1,128], index: 7, kind: input, shape index: {}]
  %s8 = inlined_call_operand.vmem [shape: bf16[2,32,32], index: 8, kind: input, shape index: {}]
  %s9 = inlined_call_operand.vmem [shape: f32[2,1,32], index: 9, kind: input, shape index: {}]
  %s10 = inlined_call_operand.vmem [shape: f32[2,1,32], index: 10, kind: input, shape index: {}]
  %s11 = inlined_call_operand.vmem [shape: f32[2,1,32], index: 11, kind: input, shape index: {}]
  %s12 = inlined_call_operand.vmem [shape: bf16[2,32,128], index: 12, kind: input, shape index: {}]
  %s13 = inlined_call_operand.vmem [shape: f32[2,1,128], index: 13, kind: input, shape index: {}]
  %s14 = inlined_call_operand.vmem [shape: bf16[2,128,32], index: 14, kind: input, shape index: {}]
  %s15 = inlined_call_operand.vmem [shape: f32[2,1,32], index: 15, kind: input, shape index: {}]
  %s16 = inlined_call_operand.vmem [shape: f32[2,1,32], index: 16, kind: input, shape index: {}]
  %s17 = inlined_call_operand.vmem [shape: f32[2,1,32], index: 17, kind: input, shape index: {}]
  %s18 = inlined_call_operand.vmem [shape: f32[32,32], index: 18, kind: input, shape index: {}]
  %s19 = inlined_call_operand.vmem [shape: f32[1,32], index: 19, kind: input, shape index: {}]
  %s20 = inlined_call_operand.vmem [shape: f32[32,128], index: 20, kind: input, shape index: {}]
  %s21 = inlined_call_operand.vmem [shape: f32[1,128], index: 21, kind: input, shape index: {}]
  %s22 = inlined_call_operand.hbm [shape: f32[2,1,128], index: 22, kind: output, shape index: {}]
  %s23 = sld [smem:[#allocation0]]
  $region117: #{bert_classifier_forward.1} parent=0
    _
  %s25 = ssub.s32 1, %s23
  %s26 = scalar_select 0, %s25, %s23
  %s28 = sshll.u32 %s0, 4
  %s29 = int_to_ptr.vmem [resolvable:$true] %s28
  %31 = dma.vmem_to_smem %s29, 32, [#allocation4], [#allocation3]
  %33 = dma.done [#allocation3], 32
  %34 = sfence
  $region1: #{bert_classifier_forward.1} parent=0
    #allocation5 [shape = 'u8[1024]{0}', space=vmem, size = 0x400, scoped, tag = 'output window, operand 0']
    #allocation6 [shape = 's32[2]{0}', space=sflag, size = 0x8, scoped, tag = 'scoped memory for bert_classifier_forward.1']
    %35 = vsyncpa [#allocation6], 0
    %s36 = scalar_lea.sflag [#allocation6], 1
    %37 = vsyncpa %s36, 0
    loop: start=0, step=1, limit=4
    $region2: #{bert_classifier_forward.1} parent=1 // loop_pre_header
      _
    $region3: #{bert_classifier_forward.1} parent=1 // loop_header
      %s39 = sphi 0, %s43
      %p40 = scmp.ge.s32.totalorder %s39, 4
      %s49 = sphi 0, %s51
      %s52 = sphi 0, %s49
      %s53 = sphi 0, %s52
      %s69 = sphi 0, %s53
      %s73 = sphi 0, %s73
      %s75 = sphi 0, %s73
      %s76 = sphi 0, %s75
      %s90 = sphi 0, %s76
      %s94 = sphi 0, %s94
      %s96 = sphi 0, %s94
      %s97 = sphi 0, %s96
      %s111 = sphi 0, %s97
      %s115 = sphi 0, %s115
      %s117 = sphi 0, %s115
      %s118 = sphi 0, %s117
      %s132 = sphi 0, %s118
      %s136 = sphi 0, %s136
      %s138 = sphi 0, %s136
      %s139 = sphi 0, %s138
      %s153 = sphi 0, %s139
      %s157 = sphi 0, %s157
      %s159 = sphi 0, %s157
      %s160 = sphi 0, %s159
      %s174 = sphi 0, %s160
      %s178 = sphi 0, %s178
      %s180 = sphi 0, %s178
      %s181 = sphi 0, %s180
      %s195 = sphi 0, %s181
      %s199 = sphi 0, %s199
      %s201 = sphi 0, %s199
      %s202 = sphi 0, %s201
      %s216 = sphi 0, %s202
      %s220 = sphi 0, %s220
      %s222 = sphi 0, %s220
      %s223 = sphi 0, %s222
      %s237 = sphi 0, %s223
      %s241 = sphi 0, %s241
      %s243 = sphi 0, %s241
      %s244 = sphi 0, %s243
      %s258 = sphi 0, %s244
      %s262 = sphi 0, %s262
      %s264 = sphi 0, %s262
      %s265 = sphi 0, %s264
      %s279 = sphi 0, %s265
      %s283 = sphi 0, %s283
      %s285 = sphi 0, %s283
      %s286 = sphi 0, %s285
      %s300 = sphi 0, %s286
      %s304 = sphi 0, %s304
      %s306 = sphi 0, %s304
      %s307 = sphi 0, %s306
      %s321 = sphi 0, %s307
      %s325 = sphi 0, %s325
      %s327 = sphi 0, %s325
      %s328 = sphi 0, %s327
      %s342 = sphi 0, %s328
      %s346 = sphi 0, %s346
      %s348 = sphi 0, %s346
      %s349 = sphi 0, %s348
      %s363 = sphi 0, %s349
      %s367 = sphi 0, %s367
      %s369 = sphi 0, %s367
      %s370 = sphi 0, %s369
      %s384 = sphi 0, %s370
      %s388 = sphi 0, %s388
      %s390 = sphi 0, %s388
      %s391 = sphi 0, %s390
      %s405 = sphi 0, %s391
      %s409 = sphi 0, %s409
      %s411 = sphi 0, %s409
      %s412 = sphi 0, %s411
      %s426 = sphi 0, %s412
      %s430 = sphi 0, %s430
      %s432 = sphi 0, %s430
      %s433 = sphi 0, %s432
      %s447 = sphi 0, %s433
      %s451 = sphi 0, %s451
      %s453 = sphi 0, %s451
      %s454 = sphi 0, %s453
      %s468 = sphi 0, %s454
      %s472 = sphi 0, %s472
      %s474 = sphi 0, %s472
      %s475 = sphi 0, %s474
      %s489 = sphi 0, %s475
      %s495 = sphi 0, %s497
      %s498 = sphi 0, %s495
      %s499 = sphi 0, %s498
      %s515 = sphi 0, %s499
    $region4: #{bert_classifier_forward.1} parent=1 // loop_header_branch
      %42 = sbr.rel (%p40) target = $region8
    $region5: #{bert_classifier_forward.1} parent=1 // loop_body
      %s44 = ssub.s32 %s39, 1
      %s45 = ssub.s32 %s39, 2
      %s46 = sadd.s32 %s39, 1
      %s47 = ssub.s32 %s39, %s46
      %p48 = scmp.eq.s32.totalorder %s47, 0
      %s50 = sadd.s32 %s49, 1
      %s51 = scalar_select %p48, %s49, %s50
      %p54 = pneg %p48
      %p55 = scmp.eq.s32.totalorder %s39, 1
      %p56 = por %p54, %p55
      %p57 = scmp.ne.s32.totalorder %s49, %s52
      %p58 = scmp.eq.s32.totalorder %s39, 0
      %p59 = por %p57, %p58
      %p60 = scmp.ne.s32.totalorder %s49, %s52
      %p61 = scmp.eq.s32.totalorder %s44, 1
      %p62 = por %p60, %p61
      %p63 = scmp.ne.s32.totalorder %s52, %s53
      %p64 = scmp.eq.s32.totalorder %s44, 0
      %p65 = por %p63, %p64
      %p66 = scmp.ne.s32.totalorder %s52, %s53
      %p67 = scmp.eq.s32.totalorder %s45, 1
      %p68 = por %p66, %p67
      %p70 = scmp.ne.s32.totalorder %s53, %s69
      %p71 = scmp.eq.s32.totalorder %s45, 0
      %p72 = por %p70, %p71
      %s74 = sadd.s32 %s73, 1
      %p77 = scmp.eq.s32.totalorder %s39, 1
      %p78 = scmp.ne.s32.totalorder %s73, %s75
      %p79 = scmp.eq.s32.totalorder %s39, 0
      %p80 = por %p78, %p79
      %p81 = scmp.ne.s32.totalorder %s73, %s75
      %p82 = scmp.eq.s32.totalorder %s44, 1
      %p83 = por %p81, %p82
      %p84 = scmp.ne.s32.totalorder %s75, %s76
      %p85 = scmp.eq.s32.totalorder %s44, 0
      %p86 = por %p84, %p85
      %p87 = scmp.ne.s32.totalorder %s75, %s76
      %p88 = scmp.eq.s32.totalorder %s45, 1
      %p89 = por %p87, %p88
      %p91 = scmp.ne.s32.totalorder %s76, %s90
      %p92 = scmp.eq.s32.totalorder %s45, 0
      %p93 = por %p91, %p92
      %s95 = sadd.s32 %s94, 1
      %p98 = scmp.eq.s32.totalorder %s39, 1
      %p99 = scmp.ne.s32.totalorder %s94, %s96
      %p100 = scmp.eq.s32.totalorder %s39, 0
      %p101 = por %p99, %p100
      %p102 = scmp.ne.s32.totalorder %s94, %s96
      %p103 = scmp.eq.s32.totalorder %s44, 1
      %p104 = por %p102, %p103
      %p105 = scmp.ne.s32.totalorder %s96, %s97
      %p106 = scmp.eq.s32.totalorder %s44, 0
      %p107 = por %p105, %p106
      %p108 = scmp.ne.s32.totalorder %s96, %s97
      %p109 = scmp.eq.s32.totalorder %s45, 1
      %p110 = por %p108, %p109
      %p112 = scmp.ne.s32.totalorder %s97, %s111
      %p113 = scmp.eq.s32.totalorder %s45, 0
      %p114 = por %p112, %p113
      %s116 = sadd.s32 %s115, 1
      %p119 = scmp.eq.s32.totalorder %s39, 1
      %p120 = scmp.ne.s32.totalorder %s115, %s117
      %p121 = scmp.eq.s32.totalorder %s39, 0
      %p122 = por %p120, %p121
      %p123 = scmp.ne.s32.totalorder %s115, %s117
      %p124 = scmp.eq.s32.totalorder %s44, 1
      %p125 = por %p123, %p124
      %p126 = scmp.ne.s32.totalorder %s117, %s118
      %p127 = scmp.eq.s32.totalorder %s44, 0
      %p128 = por %p126, %p127
      %p129 = scmp.ne.s32.totalorder %s117, %s118
      %p130 = scmp.eq.s32.totalorder %s45, 1
      %p131 = por %p129, %p130
      %p133 = scmp.ne.s32.totalorder %s118, %s132
      %p134 = scmp.eq.s32.totalorder %s45, 0
      %p135 = por %p133, %p134
      %s137 = sadd.s32 %s136, 1
      %p140 = scmp.eq.s32.totalorder %s39, 1
      %p141 = scmp.ne.s32.totalorder %s136, %s138
      %p142 = scmp.eq.s32.totalorder %s39, 0
      %p143 = por %p141, %p142
      %p144 = scmp.ne.s32.totalorder %s136, %s138
      %p145 = scmp.eq.s32.totalorder %s44, 1
      %p146 = por %p144, %p145
      %p147 = scmp.ne.s32.totalorder %s138, %s139
      %p148 = scmp.eq.s32.totalorder %s44, 0
      %p149 = por %p147, %p148
      %p150 = scmp.ne.s32.totalorder %s138, %s139
      %p151 = scmp.eq.s32.totalorder %s45, 1
      %p152 = por %p150, %p151
      %p154 = scmp.ne.s32.totalorder %s139, %s153
      %p155 = scmp.eq.s32.totalorder %s45, 0
      %p156 = por %p154, %p155
      %s158 = sadd.s32 %s157, 1
      %p161 = scmp.eq.s32.totalorder %s39, 1
      %p162 = scmp.ne.s32.totalorder %s157, %s159
      %p163 = scmp.eq.s32.totalorder %s39, 0
      %p164 = por %p162, %p163
      %p165 = scmp.ne.s32.totalorder %s157, %s159
      %p166 = scmp.eq.s32.totalorder %s44, 1
      %p167 = por %p165, %p166
      %p168 = scmp.ne.s32.totalorder %s159, %s160
      %p169 = scmp.eq.s32.totalorder %s44, 0
      %p170 = por %p168, %p169
      %p171 = scmp.ne.s32.totalorder %s159, %s160
      %p172 = scmp.eq.s32.totalorder %s45, 1
      %p173 = por %p171, %p172
      %p175 = scmp.ne.s32.totalorder %s160, %s174
      %p176 = scmp.eq.s32.totalorder %s45, 0
      %p177 = por %p175, %p176
      %s179 = sadd.s32 %s178, 1
      %p182 = scmp.eq.s32.totalorder %s39, 1
      %p183 = scmp.ne.s32.totalorder %s178, %s180
      %p184 = scmp.eq.s32.totalorder %s39, 0
      %p185 = por %p183, %p184
      %p186 = scmp.ne.s32.totalorder %s178, %s180
      %p187 = scmp.eq.s32.totalorder %s44, 1
      %p188 = por %p186, %p187
      %p189 = scmp.ne.s32.totalorder %s180, %s181
      %p190 = scmp.eq.s32.totalorder %s44, 0
      %p191 = por %p189, %p190
      %p192 = scmp.ne.s32.totalorder %s180, %s181
      %p193 = scmp.eq.s32.totalorder %s45, 1
      %p194 = por %p192, %p193
      %p196 = scmp.ne.s32.totalorder %s181, %s195
      %p197 = scmp.eq.s32.totalorder %s45, 0
      %p198 = por %p196, %p197
      %s200 = sadd.s32 %s199, 1
      %p203 = scmp.eq.s32.totalorder %s39, 1
      %p204 = scmp.ne.s32.totalorder %s199, %s201
      %p205 = scmp.eq.s32.totalorder %s39, 0
      %p206 = por %p204, %p205
      %p207 = scmp.ne.s32.totalorder %s199, %s201
      %p208 = scmp.eq.s32.totalorder %s44, 1
      %p209 = por %p207, %p208
      %p210 = scmp.ne.s32.totalorder %s201, %s202
      %p211 = scmp.eq.s32.totalorder %s44, 0
      %p212 = por %p210, %p211
      %p213 = scmp.ne.s32.totalorder %s201, %s202
      %p214 = scmp.eq.s32.totalorder %s45, 1
      %p215 = por %p213, %p214
      %p217 = scmp.ne.s32.totalorder %s202, %s216
      %p218 = scmp.eq.s32.totalorder %s45, 0
      %p219 = por %p217, %p218
      %s221 = sadd.s32 %s220, 1
      %p224 = scmp.eq.s32.totalorder %s39, 1
      %p225 = scmp.ne.s32.totalorder %s220, %s222
      %p226 = scmp.eq.s32.totalorder %s39, 0
      %p227 = por %p225, %p226
      %p228 = scmp.ne.s32.totalorder %s220, %s222
      %p229 = scmp.eq.s32.totalorder %s44, 1
      %p230 = por %p228, %p229
      %p231 = scmp.ne.s32.totalorder %s222, %s223
      %p232 = scmp.eq.s32.totalorder %s44, 0
      %p233 = por %p231, %p232
      %p234 = scmp.ne.s32.totalorder %s222, %s223
      %p235 = scmp.eq.s32.totalorder %s45, 1
      %p236 = por %p234, %p235
      %p238 = scmp.ne.s32.totalorder %s223, %s237
      %p239 = scmp.eq.s32.totalorder %s45, 0
      %p240 = por %p238, %p239
      %s242 = sadd.s32 %s241, 1
      %p245 = scmp.eq.s32.totalorder %s39, 1
      %p246 = scmp.ne.s32.totalorder %s241, %s243
      %p247 = scmp.eq.s32.totalorder %s39, 0
      %p248 = por %p246, %p247
      %p249 = scmp.ne.s32.totalorder %s241, %s243
      %p250 = scmp.eq.s32.totalorder %s44, 1
      %p251 = por %p249, %p250
      %p252 = scmp.ne.s32.totalorder %s243, %s244
      %p253 = scmp.eq.s32.totalorder %s44, 0
      %p254 = por %p252, %p253
      %p255 = scmp.ne.s32.totalorder %s243, %s244
      %p256 = scmp.eq.s32.totalorder %s45, 1
      %p257 = por %p255, %p256
      %p259 = scmp.ne.s32.totalorder %s244, %s258
      %p260 = scmp.eq.s32.totalorder %s45, 0
      %p261 = por %p259, %p260
      %s263 = sadd.s32 %s262, 1
      %p266 = scmp.eq.s32.totalorder %s39, 1
      %p267 = scmp.ne.s32.totalorder %s262, %s264
      %p268 = scmp.eq.s32.totalorder %s39, 0
      %p269 = por %p267, %p268
      %p270 = scmp.ne.s32.totalorder %s262, %s264
      %p271 = scmp.eq.s32.totalorder %s44, 1
      %p272 = por %p270, %p271
      %p273 = scmp.ne.s32.totalorder %s264, %s265
      %p274 = scmp.eq.s32.totalorder %s44, 0
      %p275 = por %p273, %p274
      %p276 = scmp.ne.s32.totalorder %s264, %s265
      %p277 = scmp.eq.s32.totalorder %s45, 1
      %p278 = por %p276, %p277
      %p280 = scmp.ne.s32.totalorder %s265, %s279
      %p281 = scmp.eq.s32.totalorder %s45, 0
      %p282 = por %p280, %p281
      %s284 = sadd.s32 %s283, 1
      %p287 = scmp.eq.s32.totalorder %s39, 1
      %p288 = scmp.ne.s32.totalorder %s283, %s285
      %p289 = scmp.eq.s32.totalorder %s39, 0
      %p290 = por %p288, %p289
      %p291 = scmp.ne.s32.totalorder %s283, %s285
      %p292 = scmp.eq.s32.totalorder %s44, 1
      %p293 = por %p291, %p292
      %p294 = scmp.ne.s32.totalorder %s285, %s286
      %p295 = scmp.eq.s32.totalorder %s44, 0
      %p296 = por %p294, %p295
      %p297 = scmp.ne.s32.totalorder %s285, %s286
      %p298 = scmp.eq.s32.totalorder %s45, 1
      %p299 = por %p297, %p298
      %p301 = scmp.ne.s32.totalorder %s286, %s300
      %p302 = scmp.eq.s32.totalorder %s45, 0
      %p303 = por %p301, %p302
      %s305 = sadd.s32 %s304, 1
      %p308 = scmp.eq.s32.totalorder %s39, 1
      %p309 = scmp.ne.s32.totalorder %s304, %s306
      %p310 = scmp.eq.s32.totalorder %s39, 0
      %p311 = por %p309, %p310
      %p312 = scmp.ne.s32.totalorder %s304, %s306
      %p313 = scmp.eq.s32.totalorder %s44, 1
      %p314 = por %p312, %p313
      %p315 = scmp.ne.s32.totalorder %s306, %s307
      %p316 = scmp.eq.s32.totalorder %s44, 0
      %p317 = por %p315, %p316
      %p318 = scmp.ne.s32.totalorder %s306, %s307
      %p319 = scmp.eq.s32.totalorder %s45, 1
      %p320 = por %p318, %p319
      %p322 = scmp.ne.s32.totalorder %s307, %s321
      %p323 = scmp.eq.s32.totalorder %s45, 0
      %p324 = por %p322, %p323
      %s326 = sadd.s32 %s325, 1
      %p329 = scmp.eq.s32.totalorder %s39, 1
      %p330 = scmp.ne.s32.totalorder %s325, %s327
      %p331 = scmp.eq.s32.totalorder %s39, 0
      %p332 = por %p330, %p331
      %p333 = scmp.ne.s32.totalorder %s325, %s327
      %p334 = scmp.eq.s32.totalorder %s44, 1
      %p335 = por %p333, %p334
      %p336 = scmp.ne.s32.totalorder %s327, %s328
      %p337 = scmp.eq.s32.totalorder %s44, 0
      %p338 = por %p336, %p337
      %p339 = scmp.ne.s32.totalorder %s327, %s328
      %p340 = scmp.eq.s32.totalorder %s45, 1
      %p341 = por %p339, %p340
      %p343 = scmp.ne.s32.totalorder %s328, %s342
      %p344 = scmp.eq.s32.totalorder %s45, 0
      %p345 = por %p343, %p344
      %s347 = sadd.s32 %s346, 1
      %p350 = scmp.eq.s32.totalorder %s39, 1
      %p351 = scmp.ne.s32.totalorder %s346, %s348
      %p352 = scmp.eq.s32.totalorder %s39, 0
      %p353 = por %p351, %p352
      %p354 = scmp.ne.s32.totalorder %s346, %s348
      %p355 = scmp.eq.s32.totalorder %s44, 1
      %p356 = por %p354, %p355
      %p357 = scmp.ne.s32.totalorder %s348, %s349
      %p358 = scmp.eq.s32.totalorder %s44, 0
      %p359 = por %p357, %p358
      %p360 = scmp.ne.s32.totalorder %s348, %s349
      %p361 = scmp.eq.s32.totalorder %s45, 1
      %p362 = por %p360, %p361
      %p364 = scmp.ne.s32.totalorder %s349, %s363
      %p365 = scmp.eq.s32.totalorder %s45, 0
      %p366 = por %p364, %p365
      %s368 = sadd.s32 %s367, 1
      %p371 = scmp.eq.s32.totalorder %s39, 1
      %p372 = scmp.ne.s32.totalorder %s367, %s369
      %p373 = scmp.eq.s32.totalorder %s39, 0
      %p374 = por %p372, %p373
      %p375 = scmp.ne.s32.totalorder %s367, %s369
      %p376 = scmp.eq.s32.totalorder %s44, 1
      %p377 = por %p375, %p376
      %p378 = scmp.ne.s32.totalorder %s369, %s370
      %p379 = scmp.eq.s32.totalorder %s44, 0
      %p380 = por %p378, %p379
      %p381 = scmp.ne.s32.totalorder %s369, %s370
      %p382 = scmp.eq.s32.totalorder %s45, 1
      %p383 = por %p381, %p382
      %p385 = scmp.ne.s32.totalorder %s370, %s384
      %p386 = scmp.eq.s32.totalorder %s45, 0
      %p387 = por %p385, %p386
      %s389 = sadd.s32 %s388, 1
      %p392 = scmp.eq.s32.totalorder %s39, 1
      %p393 = scmp.ne.s32.totalorder %s388, %s390
      %p394 = scmp.eq.s32.totalorder %s39, 0
      %p395 = por %p393, %p394
      %p396 = scmp.ne.s32.totalorder %s388, %s390
      %p397 = scmp.eq.s32.totalorder %s44, 1
      %p398 = por %p396, %p397
      %p399 = scmp.ne.s32.totalorder %s390, %s391
      %p400 = scmp.eq.s32.totalorder %s44, 0
      %p401 = por %p399, %p400
      %p402 = scmp.ne.s32.totalorder %s390, %s391
      %p403 = scmp.eq.s32.totalorder %s45, 1
      %p404 = por %p402, %p403
      %p406 = scmp.ne.s32.totalorder %s391, %s405
      %p407 = scmp.eq.s32.totalorder %s45, 0
      %p408 = por %p406, %p407
      %s410 = sadd.s32 %s409, 1
      %p413 = scmp.eq.s32.totalorder %s39, 1
      %p414 = scmp.ne.s32.totalorder %s409, %s411
      %p415 = scmp.eq.s32.totalorder %s39, 0
      %p416 = por %p414, %p415
      %p417 = scmp.ne.s32.totalorder %s409, %s411
      %p418 = scmp.eq.s32.totalorder %s44, 1
      %p419 = por %p417, %p418
      %p420 = scmp.ne.s32.totalorder %s411, %s412
      %p421 = scmp.eq.s32.totalorder %s44, 0
      %p422 = por %p420, %p421
      %p423 = scmp.ne.s32.totalorder %s411, %s412
      %p424 = scmp.eq.s32.totalorder %s45, 1
      %p425 = por %p423, %p424
      %p427 = scmp.ne.s32.totalorder %s412, %s426
      %p428 = scmp.eq.s32.totalorder %s45, 0
      %p429 = por %p427, %p428
      %s431 = sadd.s32 %s430, 1
      %p434 = scmp.eq.s32.totalorder %s39, 1
      %p435 = scmp.ne.s32.totalorder %s430, %s432
      %p436 = scmp.eq.s32.totalorder %s39, 0
      %p437 = por %p435, %p436
      %p438 = scmp.ne.s32.totalorder %s430, %s432
      %p439 = scmp.eq.s32.totalorder %s44, 1
      %p440 = por %p438, %p439
      %p441 = scmp.ne.s32.totalorder %s432, %s433
      %p442 = scmp.eq.s32.totalorder %s44, 0
      %p443 = por %p441, %p442
      %p444 = scmp.ne.s32.totalorder %s432, %s433
      %p445 = scmp.eq.s32.totalorder %s45, 1
      %p446 = por %p444, %p445
      %p448 = scmp.ne.s32.totalorder %s433, %s447
      %p449 = scmp.eq.s32.totalorder %s45, 0
      %p450 = por %p448, %p449
      %s452 = sadd.s32 %s451, 1
      %p455 = scmp.eq.s32.totalorder %s39, 1
      %p456 = scmp.ne.s32.totalorder %s451, %s453
      %p457 = scmp.eq.s32.totalorder %s39, 0
      %p458 = por %p456, %p457
      %p459 = scmp.ne.s32.totalorder %s451, %s453
      %p460 = scmp.eq.s32.totalorder %s44, 1
      %p461 = por %p459, %p460
      %p462 = scmp.ne.s32.totalorder %s453, %s454
      %p463 = scmp.eq.s32.totalorder %s44, 0
      %p464 = por %p462, %p463
      %p465 = scmp.ne.s32.totalorder %s453, %s454
      %p466 = scmp.eq.s32.totalorder %s45, 1
      %p467 = por %p465, %p466
      %p469 = scmp.ne.s32.totalorder %s454, %s468
      %p470 = scmp.eq.s32.totalorder %s45, 0
      %p471 = por %p469, %p470
      %s473 = sadd.s32 %s472, 1
      %p476 = scmp.eq.s32.totalorder %s39, 1
      %p477 = scmp.ne.s32.totalorder %s472, %s474
      %p478 = scmp.eq.s32.totalorder %s39, 0
      %p479 = por %p477, %p478
      %p480 = scmp.ne.s32.totalorder %s472, %s474
      %p481 = scmp.eq.s32.totalorder %s44, 1
      %p482 = por %p480, %p481
      %p483 = scmp.ne.s32.totalorder %s474, %s475
      %p484 = scmp.eq.s32.totalorder %s44, 0
      %p485 = por %p483, %p484
      %p486 = scmp.ne.s32.totalorder %s474, %s475
      %p487 = scmp.eq.s32.totalorder %s45, 1
      %p488 = por %p486, %p487
      %p490 = scmp.ne.s32.totalorder %s475, %s489
      %p491 = scmp.eq.s32.totalorder %s45, 0
      %p492 = por %p490, %p491
      %s493 = ssub.s32 %s39, %s46
      %p494 = scmp.eq.s32.totalorder %s493, 0
      %s496 = sadd.s32 %s495, 1
      %s497 = scalar_select %p494, %s495, %s496
      %p500 = pneg %p494
      %p501 = scmp.eq.s32.totalorder %s39, 1
      %p502 = por %p500, %p501
      %p503 = scmp.ne.s32.totalorder %s495, %s498
      %p504 = scmp.eq.s32.totalorder %s39, 0
      %p505 = por %p503, %p504
      %p506 = scmp.ne.s32.totalorder %s495, %s498
      %p507 = scmp.eq.s32.totalorder %s44, 1
      %p508 = por %p506, %p507
      %p509 = scmp.ne.s32.totalorder %s498, %s499
      %p510 = scmp.eq.s32.totalorder %s44, 0
      %p511 = por %p509, %p510
      %p512 = scmp.ne.s32.totalorder %s498, %s499
      %p513 = scmp.eq.s32.totalorder %s45, 1
      %p514 = por %p512, %p513
      %p516 = scmp.ne.s32.totalorder %s499, %s515
      %p517 = scmp.eq.s32.totalorder %s45, 0
      %p518 = por %p516, %p517
      %p519 = scmp.le.s32.totalorder 1, %s39
      %p520 = scmp.lt.s32.totalorder %s39, 3
      %p521 = pnand %p519, %p520
      %p522 = pneg %p521
      // Predicated region
      $region9: #{bert_classifier_forward.1} parent=5 // pred_check
        _
      $region10: #{bert_classifier_forward.1} parent=5 // pred_check_branch
        %524 = sbr.rel (%p521) target = $region12
      $region11: #{bert_classifier_forward.1} parent=5 // pred_region
        %s525 = ssub.s32 %s39, 1
        // Predicated region
        $region13: #{bert_classifier_forward.1} parent=11 // pred_check
          %p526 = pneg %p86
        $region14: #{bert_classifier_forward.1} parent=11 // pred_check_branch
          %528 = sbr.rel (%p526) target = $region16
        $region15: #{bert_classifier_forward.1} parent=11 // pred_region
          _
        $region16: #{bert_classifier_forward.1} parent=11 // pred_fallthru
          _
        // Predicated region
        $region17: #{bert_classifier_forward.1} parent=11 // pred_check
          %p529 = pneg %p107
        $region18: #{bert_classifier_forward.1} parent=11 // pred_check_branch
          %531 = sbr.rel (%p529) target = $region20
        $region19: #{bert_classifier_forward.1} parent=11 // pred_region
          _
        $region20: #{bert_classifier_forward.1} parent=11 // pred_fallthru
          _
        // Predicated region
        $region21: #{bert_classifier_forward.1} parent=11 // pred_check
          %p532 = pneg %p128
        $region22: #{bert_classifier_forward.1} parent=11 // pred_check_branch
          %534 = sbr.rel (%p532) target = $region24
        $region23: #{bert_classifier_forward.1} parent=11 // pred_region
          _
        $region24: #{bert_classifier_forward.1} parent=11 // pred_fallthru
          _
        // Predicated region
        $region25: #{bert_classifier_forward.1} parent=11 // pred_check
          %p535 = pneg %p149
        $region26: #{bert_classifier_forward.1} parent=11 // pred_check_branch
          %537 = sbr.rel (%p535) target = $region28
        $region27: #{bert_classifier_forward.1} parent=11 // pred_region
          _
        $region28: #{bert_classifier_forward.1} parent=11 // pred_fallthru
          _
        // Predicated region
        $region29: #{bert_classifier_forward.1} parent=11 // pred_check
          %p538 = pneg %p170
        $region30: #{bert_classifier_forward.1} parent=11 // pred_check_branch
          %540 = sbr.rel (%p538) target = $region32
        $region31: #{bert_classifier_forward.1} parent=11 // pred_region
          _
        $region32: #{bert_classifier_forward.1} parent=11 // pred_fallthru
          _
        // Predicated region
        $region33: #{bert_classifier_forward.1} parent=11 // pred_check
          %p541 = pneg %p191
        $region34: #{bert_classifier_forward.1} parent=11 // pred_check_branch
          %543 = sbr.rel (%p541) target = $region36
        $region35: #{bert_classifier_forward.1} parent=11 // pred_region
          _
        $region36: #{bert_classifier_forward.1} parent=11 // pred_fallthru
          _
        // Predicated region
        $region37: #{bert_classifier_forward.1} parent=11 // pred_check
          %p544 = pneg %p212
        $region38: #{bert_classifier_forward.1} parent=11 // pred_check_branch
          %546 = sbr.rel (%p544) target = $region40
        $region39: #{bert_classifier_forward.1} parent=11 // pred_region
          _
        $region40: #{bert_classifier_forward.1} parent=11 // pred_fallthru
          _
        // Predicated region
        $region41: #{bert_classifier_forward.1} parent=11 // pred_check
          %p547 = pneg %p233
        $region42: #{bert_classifier_forward.1} parent=11 // pred_check_branch
          %549 = sbr.rel (%p547) target = $region44
        $region43: #{bert_classifier_forward.1} parent=11 // pred_region
          _
        $region44: #{bert_classifier_forward.1} parent=11 // pred_fallthru
          _
        // Predicated region
        $region45: #{bert_classifier_forward.1} parent=11 // pred_check
          %p550 = pneg %p254
        $region46: #{bert_classifier_forward.1} parent=11 // pred_check_branch
          %552 = sbr.rel (%p550) target = $region48
        $region47: #{bert_classifier_forward.1} parent=11 // pred_region
          _
        $region48: #{bert_classifier_forward.1} parent=11 // pred_fallthru
          _
        // Predicated region
        $region49: #{bert_classifier_forward.1} parent=11 // pred_check
          %p553 = pneg %p275
        $region50: #{bert_classifier_forward.1} parent=11 // pred_check_branch
          %555 = sbr.rel (%p553) target = $region52
        $region51: #{bert_classifier_forward.1} parent=11 // pred_region
          _
        $region52: #{bert_classifier_forward.1} parent=11 // pred_fallthru
          _
        // Predicated region
        $region53: #{bert_classifier_forward.1} parent=11 // pred_check
          %p556 = pneg %p296
        $region54: #{bert_classifier_forward.1} parent=11 // pred_check_branch
          %558 = sbr.rel (%p556) target = $region56
        $region55: #{bert_classifier_forward.1} parent=11 // pred_region
          _
        $region56: #{bert_classifier_forward.1} parent=11 // pred_fallthru
          _
        // Predicated region
        $region57: #{bert_classifier_forward.1} parent=11 // pred_check
          %p559 = pneg %p317
        $region58: #{bert_classifier_forward.1} parent=11 // pred_check_branch
          %561 = sbr.rel (%p559) target = $region60
        $region59: #{bert_classifier_forward.1} parent=11 // pred_region
          _
        $region60: #{bert_classifier_forward.1} parent=11 // pred_fallthru
          _
        // Predicated region
        $region61: #{bert_classifier_forward.1} parent=11 // pred_check
          %p562 = pneg %p338
        $region62: #{bert_classifier_forward.1} parent=11 // pred_check_branch
          %564 = sbr.rel (%p562) target = $region64
        $region63: #{bert_classifier_forward.1} parent=11 // pred_region
          _
        $region64: #{bert_classifier_forward.1} parent=11 // pred_fallthru
          _
        // Predicated region
        $region65: #{bert_classifier_forward.1} parent=11 // pred_check
          %p565 = pneg %p359
        $region66: #{bert_classifier_forward.1} parent=11 // pred_check_branch
          %567 = sbr.rel (%p565) target = $region68
        $region67: #{bert_classifier_forward.1} parent=11 // pred_region
          _
        $region68: #{bert_classifier_forward.1} parent=11 // pred_fallthru
          _
        // Predicated region
        $region69: #{bert_classifier_forward.1} parent=11 // pred_check
          %p568 = pneg %p380
        $region70: #{bert_classifier_forward.1} parent=11 // pred_check_branch
          %570 = sbr.rel (%p568) target = $region72
        $region71: #{bert_classifier_forward.1} parent=11 // pred_region
          _
        $region72: #{bert_classifier_forward.1} parent=11 // pred_fallthru
          _
        // Predicated region
        $region73: #{bert_classifier_forward.1} parent=11 // pred_check
          %p571 = pneg %p401
        $region74: #{bert_classifier_forward.1} parent=11 // pred_check_branch
          %573 = sbr.rel (%p571) target = $region76
        $region75: #{bert_classifier_forward.1} parent=11 // pred_region
          _
        $region76: #{bert_classifier_forward.1} parent=11 // pred_fallthru
          _
        // Predicated region
        $region77: #{bert_classifier_forward.1} parent=11 // pred_check
          %p574 = pneg %p422
        $region78: #{bert_classifier_forward.1} parent=11 // pred_check_branch
          %576 = sbr.rel (%p574) target = $region80
        $region79: #{bert_classifier_forward.1} parent=11 // pred_region
          _
        $region80: #{bert_classifier_forward.1} parent=11 // pred_fallthru
          _
        // Predicated region
        $region81: #{bert_classifier_forward.1} parent=11 // pred_check
          %p577 = pneg %p443
        $region82: #{bert_classifier_forward.1} parent=11 // pred_check_branch
          %579 = sbr.rel (%p577) target = $region84
        $region83: #{bert_classifier_forward.1} parent=11 // pred_region
          _
        $region84: #{bert_classifier_forward.1} parent=11 // pred_fallthru
          _
        // Predicated region
        $region85: #{bert_classifier_forward.1} parent=11 // pred_check
          %p580 = pneg %p464
        $region86: #{bert_classifier_forward.1} parent=11 // pred_check_branch
          %582 = sbr.rel (%p580) target = $region88
        $region87: #{bert_classifier_forward.1} parent=11 // pred_region
          _
        $region88: #{bert_classifier_forward.1} parent=11 // pred_fallthru
          _
        // Predicated region
        $region89: #{bert_classifier_forward.1} parent=11 // pred_check
          %p583 = pneg %p485
        $region90: #{bert_classifier_forward.1} parent=11 // pred_check_branch
          %585 = sbr.rel (%p583) target = $region92
        $region91: #{bert_classifier_forward.1} parent=11 // pred_region
          _
        $region92: #{bert_classifier_forward.1} parent=11 // pred_fallthru
          _
      $region12: #{bert_classifier_forward.1} parent=5 // pred_fallthru
        _
      %p586 = scmp.lt.s32.totalorder %s39, 2
      // Predicated region
      $region93: #{bert_classifier_forward.1} parent=5 // pred_check
        %p587 = pneg %p586
      $region94: #{bert_classifier_forward.1} parent=5 // pred_check_branch
        %589 = sbr.rel (%p587) target = $region96
      $region95: #{bert_classifier_forward.1} parent=5 // pred_region
        // Predicated region
        $region97: #{bert_classifier_forward.1} parent=95 // pred_check
          %p590 = pneg %p59
        $region98: #{bert_classifier_forward.1} parent=95 // pred_check_branch
          %592 = sbr.rel (%p590) target = $region100
        $region99: #{bert_classifier_forward.1} parent=95 // pred_region
          %p593 = scmp.lt.s32.totalorder %s39, 1
          %s594 = scalar_select %p593, %s39, 1
          %s595 = scalar_lea.vmem %s1, %s594
        $region100: #{bert_classifier_forward.1} parent=95 // pred_fallthru
          _
      $region96: #{bert_classifier_forward.1} parent=5 // pred_fallthru
        _
      %p596 = scmp.le.s32.totalorder 1, %s39
      %p597 = scmp.lt.s32.totalorder %s39, 3
      %p598 = pnand %p596, %p597
      %p599 = pneg %p598
      // Predicated region
      $region101: #{bert_classifier_forward.1} parent=5 // pred_check
        _
      $region102: #{bert_classifier_forward.1} parent=5 // pred_check_branch
        %601 = sbr.rel (%p598) target = $region104
      $region103: #{bert_classifier_forward.1} parent=5 // pred_region
        %s602 = ssub.s32 %s39, 1
        %p603 = scmp.lt.s32.totalorder %s44, 1
        %s604 = scalar_select %p603, %s44, 1
        %s605 = scalar_lea.vmem %s1, %s604
        %p606 = pneg %p65
        %p607 = pneg %p62
        %p608 = pneg %p86
        %p609 = pneg %p83
        %p610 = pneg %p107
        %p611 = pneg %p104
        %p612 = pneg %p128
        %p613 = pneg %p125
        %p614 = pneg %p149
        %p615 = pneg %p146
        %p616 = pneg %p170
        %p617 = pneg %p167
        %p618 = pneg %p191
        %p619 = pneg %p188
        %p620 = pneg %p212
        %p621 = pneg %p209
        %p622 = pneg %p233
        %p623 = pneg %p230
        %p624 = pneg %p254
        %p625 = pneg %p251
        %p626 = pneg %p275
        %p627 = pneg %p272
        %p628 = pneg %p296
        %p629 = pneg %p293
        %p630 = pneg %p317
        %p631 = pneg %p314
        %p632 = pneg %p338
        %p633 = pneg %p335
        %p634 = pneg %p359
        %p635 = pneg %p356
        %p636 = pneg %p380
        %p637 = pneg %p377
        %p638 = pneg %p401
        %p639 = pneg %p398
        %p640 = pneg %p422
        %p641 = pneg %p419
        %p642 = pneg %p443
        %p643 = pneg %p440
        %p644 = pneg %p464
        %p645 = pneg %p461
        %p646 = pneg %p485
        %p647 = pneg %p482
        %p648 = pneg %p511
        %p649 = pneg %p508
        %s650 = sand.u32 %s498, 1
        %s651 = scalar_lea.sflag [#allocation6], %s650
        %s652 = sand.u32 %s498, 1
        %s653 = scalar_lea.vmem [#allocation5], %s652
        %p654 = scmp.lt.s32.totalorder %s44, 1
        %s655 = scalar_select %p654, %s44, 1
        %s656 = scalar_lea.vmem %s1, %s655
        %s658 = smul.u32 %s44, 128
        %s659 = sld [smem:[#allocation4 + %s658]]
        %s660 = scalar_lea.vmem %s2, %s659
        %v661 = vld [vmem:[%s660] sm:$0x1]
        %vm662 = vcmask 253952
        %663 = vst.msk [vmem:[#allocation2] sm:$0x1] %vm662, %v661
        %s664 = sadd.s32 %s658, 1
        %s665 = sld [smem:[#allocation4 + %s664]]
        %s666 = scalar_lea.vmem %s2, %s665
        %v667 = vld [vmem:[%s666] sm:$0x1]
        %668 = vst.msk [vmem:[#allocation2 + $0x1] sm:$0x1] %vm662, %v667
        %s669 = sadd.s32 %s658, 2
        %s670 = sld [smem:[#allocation4 + %s669]]
        %s671 = scalar_lea.vmem %s2, %s670
        %v672 = vld [vmem:[%s671] sm:$0x1]
        %673 = vst.msk [vmem:[#allocation2 + $0x2] sm:$0x1] %vm662, %v672
        %s674 = sadd.s32 %s658, 3
        %s675 = sld [smem:[#allocation4 + %s674]]
        %s676 = scalar_lea.vmem %s2, %s675
        %v677 = vld [vmem:[%s676] sm:$0x1]
        %678 = vst.msk [vmem:[#allocation2 + $0x3] sm:$0x1] %vm662, %v677
        %s679 = sadd.s32 %s658, 4
        %s680 = sld [smem:[#allocation4 + %s679]]
        %s681 = scalar_lea.vmem %s2, %s680
        %v682 = vld [vmem:[%s681] sm:$0x1]
        %683 = vst.msk [vmem:[#allocation2 + $0x4] sm:$0x1] %vm662, %v682
        %s684 = sadd.s32 %s658, 5
        %s685 = sld [smem:[#allocation4 + %s684]]
        %s686 = scalar_lea.vmem %s2, %s685
        %v687 = vld [vmem:[%s686] sm:$0x1]
        %688 = vst.msk [vmem:[#allocation2 + $0x5] sm:$0x1] %vm662, %v687
        %s689 = sadd.s32 %s658, 6
        %s690 = sld [smem:[#allocation4 + %s689]]
        %s691 = scalar_lea.vmem %s2, %s690
        %v692 = vld [vmem:[%s691] sm:$0x1]
        %693 = vst.msk [vmem:[#allocation2 + $0x6] sm:$0x1] %vm662, %v692
        %s694 = sadd.s32 %s658, 7
        %s695 = sld [smem:[#allocation4 + %s694]]
        %s696 = scalar_lea.vmem %s2, %s695
        %v697 = vld [vmem:[%s696] sm:$0x1]
        %698 = vst.msk [vmem:[#allocation2 + $0x7] sm:$0x1] %vm662, %v697
        %v699 = vld [vmem:[#allocation2] sm:$0xff]
        %v700 = vld [vmem:[%s3] sm:$0xff]
        %v701 = vadd.f32 %v699, %v700
        %v702 = vld [vmem:[%s4] sm:$0x1]
        %v703 = vld [vmem:[%s5] sm:$0x1]
        %vm704 = vcmask 261120
        %v705 = vsel %vm704, %v701, 0.0
        %706 = vadd.xlane.f32.xlu0 %v705
        %v707 = vpop.xlane.xlu0 %706
        %v708 = vrcp.pop 32.0
        %v709 = vmul.f32 32.0, %v708
        %v710 = vsub.f32 1.0, %v709
        %v711 = vmul.f32 %v708, %v710
        %v712 = vadd.f32 %v708, %v711
        %vm713 = vweird.f32 %v708
        %v714 = vsel %vm713, %v708, %v712
        %v715 = vmul.f32 %v707, %v714
        %v716 = vsub.f32 %v701, %v715
        %v717 = vmul.f32 %v716, %v716
        %v718 = vsel %vm704, %v717, 0.0
        %719 = vadd.xlane.f32.xlu0 %v718
        %v720 = vpop.xlane.xlu0 %719
        %v721 = vmul.f32 %v720, %v714
        %v722 = vadd.f32 %v721, 1e-12
        %v723 = vrsqrt.pop %v722
        %v724 = vmul.f32 %v723, %v722
        %v725 = vmul.f32 %v724, %v723
        %v726 = vmul.f32 0.5, %v725
        %v727 = vsub.f32 1.5, %v726
        %v728 = vmul.f32 %v723, %v727
        %vm729 = vweird.f32 %v722
        %vm730 = vweird.f32 %v723
        %vm731 = vmor %vm729, %vm730
        %v732 = vsel %vm731, %v723, %v728
        %v733 = vmul.f32 %v716, %v732
        %v735 = vperm.slane %v702, 0
        %v737 = vmul.f32 %v733, %v735
        %v739 = vperm.slane %v703, 0
        %v741 = vadd.f32 %v737, %v739
        %v742 = vld [vmem:[%s656] sm:$0x1]
        %v743 = vcvt.s32.f32 %v742
        %v744 = vsub.f32 1.0, %v743
        %v745 = vmul.f32 %v744, -10000.0
        %v747 = vperm.slane %v745, 0
        %v749 = vpack.c.bf16 %v741, %v741
        %v750 = vld [vmem:[%s6] sm:$0xf]
        %v751 = vld [vmem:[%s6 + $0x4] sm:$0xf]
        %v752 = vld [vmem:[%s6 + $0x8] sm:$0xf]
        %v753 = vld [vmem:[%s6 + $0xc] sm:$0xf]
        %v754 = vld [vmem:[%s7] sm:$0x1]
        %v756 = vperm.slane %v754, 0
        %v762 = vunpack.c.l.b16 %v750
        %v763 = vunpack.c.l.b16 %v751
        %v764 = vunpack.c.l.b16 %v752
        %v765 = vunpack.c.l.b16 %v753
        %v766 = vpack.c.b16 %v763, %v762
        %v767 = vpack.c.b16 %v765, %v764
        %v771 = vsel %vm704, %v749, 0
        %773 = vmatpush.bf16.msra.mxu0 0
        %774 = vmatpush.bf16.msra.mxu0 0
        %775 = vmatpush.bf16.msra.mxu0 0
        %776 = vmatpush.bf16.msra.mxu0 0
        %777 = vmatpush.bf16.msra.mxu0 0
        %778 = vmatpush.bf16.msra.mxu0 0
        %779 = vmatpush.bf16.msra.mxu0 %v767
        %780 = vmatpush.bf16.msra.mxu0 %v766
        %781 = vmatmul.bf16.gmra.mxu0 %v771
        %v782 = vpop.f32.mrf.mxu0
        %v783 = vadd.f32 %v756, %v782
        %v784 = vpop.f32.mrf.mxu0
        %785 = vdwg.mxu0
        %v786 = vpack.c.bf16 %v783, %v783
        %v788 = vunpack.c.l.b16 %v786
        %v789 = vpack.c.b16 %v788, %v788
        %790 = vrot.lane.b32.xlu0 %v789, 96
        %v791 = vpop.permute.xlu0 %790
        %vm792 = vcmask 64512
        %v794 = vsel %vm792, %v786, 0
        %v797 = vsel %vm792, %v791, 0
        %799 = vmatpush.bf16.xpose.msra.mxu0 0
        %800 = vmatpush.bf16.xpose.msra.mxu0 0
        %801 = vmatpush.bf16.xpose.msra.mxu0 0
        %802 = vmatpush.bf16.xpose.msra.mxu0 0
        %803 = vmatpush.bf16.xpose.msra.mxu0 0
        %804 = vmatpush.bf16.xpose.msra.mxu0 0
        %805 = vmatpush.bf16.xpose.msra.mxu0 0
        %806 = vmatpush.bf16.xpose.msra.mxu0 %v797
        %807 = vmatmul.bf16.gmra.mxu0 %v794
        %v808 = vpop.f32.mrf.mxu0
        %v809 = vadd.f32 0.0, %v808
        %v810 = vpop.f32.mrf.mxu0
        %811 = vdwg.mxu0
        %v812 = vmul.f32 %v809, 0.35355338
        %v813 = vadd.f32 %v812, %v747
        %v814 = vmul.f32 %v813, 1.442695
        %v815 = vpow.pop %v814
        %v816 = vsel %vm792, %v815, 0.0
        %817 = vadd.xlane.f32.xlu0 %v816
        %v818 = vpop.xlane.xlu0 %817
        %v819 = vrcp.pop %v818
        %v820 = vmul.f32 %v815, %v819
        %v821 = vpack.c.bf16 %v820, %v820
        %822 = vrot.lane.b32.xlu0 %v789, 64
        %v823 = vpop.permute.xlu0 %822
        %v825 = vsel %vm792, %v821, 0
        %vm827 = vcmask 1043456
        %v829 = vsel %vm827, %v823, 0
        %831 = vmatpush.bf16.msra.mxu0 0
        %832 = vmatpush.bf16.msra.mxu0 0
        %833 = vmatpush.bf16.msra.mxu0 0
        %834 = vmatpush.bf16.msra.mxu0 0
        %835 = vmatpush.bf16.msra.mxu0 0
        %836 = vmatpush.bf16.msra.mxu0 0
        %837 = vmatpush.bf16.msra.mxu0 0
        %838 = vmatpush.bf16.msra.mxu0 %v829
        %839 = vmatmul.bf16.gmra.mxu0 %v825
        %v840 = vpop.f32.mrf.mxu0
        %v841 = vadd.f32 0.0, %v840
        %v842 = vpop.f32.mrf.mxu0
        %843 = vdwg.mxu0
        %844 = vrot.lane.b32.xlu0 %v789, 120
        %v845 = vpop.permute.xlu0 %844
        %846 = vrot.lane.b32.xlu0 %v789, 88
        %v847 = vpop.permute.xlu0 %846
        %v849 = vsel %vm792, %v845, 0
        %v852 = vsel %vm792, %v847, 0
        %854 = vmatpush.bf16.xpose.msra.mxu0 0
        %855 = vmatpush.bf16.xpose.msra.mxu0 0
        %856 = vmatpush.bf16.xpose.msra.mxu0 0
        %857 = vmatpush.bf16.xpose.msra.mxu0 0
        %858 = vmatpush.bf16.xpose.msra.mxu0 0
        %859 = vmatpush.bf16.xpose.msra.mxu0 0
        %860 = vmatpush.bf16.xpose.msra.mxu0 0
        %861 = vmatpush.bf16.xpose.msra.mxu0 %v852
        %862 = vmatmul.bf16.gmra.mxu0 %v849
        %v863 = vpop.f32.mrf.mxu0
        %v864 = vadd.f32 0.0, %v863
        %v865 = vpop.f32.mrf.mxu0
        %866 = vdwg.mxu0
        %v867 = vmul.f32 %v864, 0.35355338
        %v868 = vadd.f32 %v867, %v747
        %v869 = vmul.f32 %v868, 1.442695
        %v870 = vpow.pop %v869
        %v871 = vsel %vm792, %v870, 0.0
        %872 = vadd.xlane.f32.xlu0 %v871
        %v873 = vpop.xlane.xlu0 %872
        %v874 = vrcp.pop %v873
        %v875 = vmul.f32 %v870, %v874
        %v876 = vpack.c.bf16 %v875, %v875
        %877 = vrot.lane.b32.xlu0 %v789, 56
        %v878 = vpop.permute.xlu0 %877
        %v880 = vsel %vm792, %v876, 0
        %v883 = vsel %vm827, %v878, 0
        %885 = vmatpush.bf16.msra.mxu0 0
        %886 = vmatpush.bf16.msra.mxu0 0
        %887 = vmatpush.bf16.msra.mxu0 0
        %888 = vmatpush.bf16.msra.mxu0 0
        %889 = vmatpush.bf16.msra.mxu0 0
        %890 = vmatpush.bf16.msra.mxu0 0
        %891 = vmatpush.bf16.msra.mxu0 0
        %892 = vmatpush.bf16.msra.mxu0 %v883
        %893 = vmatmul.bf16.gmra.mxu0 %v880
        %v894 = vpop.f32.mrf.mxu0
        %v895 = vadd.f32 0.0, %v894
        %v896 = vpop.f32.mrf.mxu0
        %897 = vdwg.mxu0
        %898 = vrot.lane.b32.xlu0 %v789, 112
        %v899 = vpop.permute.xlu0 %898
        %900 = vrot.lane.b32.xlu0 %v789, 80
        %v901 = vpop.permute.xlu0 %900
        %v903 = vsel %vm792, %v899, 0
        %v906 = vsel %vm792, %v901, 0
        %908 = vmatpush.bf16.xpose.msra.mxu0 0
        %909 = vmatpush.bf16.xpose.msra.mxu0 0
        %910 = vmatpush.bf16.xpose.msra.mxu0 0
        %911 = vmatpush.bf16.xpose.msra.mxu0 0
        %912 = vmatpush.bf16.xpose.msra.mxu0 0
        %913 = vmatpush.bf16.xpose.msra.mxu0 0
        %914 = vmatpush.bf16.xpose.msra.mxu0 0
        %915 = vmatpush.bf16.xpose.msra.mxu0 %v906
        %916 = vmatmul.bf16.gmra.mxu0 %v903
        %v917 = vpop.f32.mrf.mxu0
        %v918 = vadd.f32 0.0, %v917
        %v919 = vpop.f32.mrf.mxu0
        %920 = vdwg.mxu0
        %v921 = vmul.f32 %v918, 0.35355338
        %v922 = vadd.f32 %v921, %v747
        %v923 = vmul.f32 %v922, 1.442695
        %v924 = vpow.pop %v923
        %v925 = vsel %vm792, %v924, 0.0
        %926 = vadd.xlane.f32.xlu0 %v925
        %v927 = vpop.xlane.xlu0 %926
        %v928 = vrcp.pop %v927
        %v929 = vmul.f32 %v924, %v928
        %v930 = vpack.c.bf16 %v929, %v929
        %931 = vrot.lane.b32.xlu0 %v789, 48
        %v932 = vpop.permute.xlu0 %931
        %v934 = vsel %vm792, %v930, 0
        %v937 = vsel %vm827, %v932, 0
        %939 = vmatpush.bf16.msra.mxu0 0
        %940 = vmatpush.bf16.msra.mxu0 0
        %941 = vmatpush.bf16.msra.mxu0 0
        %942 = vmatpush.bf16.msra.mxu0 0
        %943 = vmatpush.bf16.msra.mxu0 0
        %944 = vmatpush.bf16.msra.mxu0 0
        %945 = vmatpush.bf16.msra.mxu0 0
        %946 = vmatpush.bf16.msra.mxu0 %v937
        %947 = vmatmul.bf16.gmra.mxu0 %v934
        %v948 = vpop.f32.mrf.mxu0
        %v949 = vadd.f32 0.0, %v948
        %v950 = vpop.f32.mrf.mxu0
        %951 = vdwg.mxu0
        %952 = vrot.lane.b32.xlu0 %v789, 104
        %v953 = vpop.permute.xlu0 %952
        %954 = vrot.lane.b32.xlu0 %v789, 72
        %v955 = vpop.permute.xlu0 %954
        %v957 = vsel %vm792, %v953, 0
        %v960 = vsel %vm792, %v955, 0
        %962 = vmatpush.bf16.xpose.msra.mxu0 0
        %963 = vmatpush.bf16.xpose.msra.mxu0 0
        %964 = vmatpush.bf16.xpose.msra.mxu0 0
        %965 = vmatpush.bf16.xpose.msra.mxu0 0
        %966 = vmatpush.bf16.xpose.msra.mxu0 0
        %967 = vmatpush.bf16.xpose.msra.mxu0 0
        %968 = vmatpush.bf16.xpose.msra.mxu0 0
        %969 = vmatpush.bf16.xpose.msra.mxu0 %v960
        %970 = vmatmul.bf16.gmra.mxu0 %v957
        %v971 = vpop.f32.mrf.mxu0
        %v972 = vadd.f32 0.0, %v971
        %v973 = vpop.f32.mrf.mxu0
        %974 = vdwg.mxu0
        %v975 = vmul.f32 %v972, 0.35355338
        %v976 = vadd.f32 %v975, %v747
        %v977 = vmul.f32 %v976, 1.442695
        %v978 = vpow.pop %v977
        %v979 = vsel %vm792, %v978, 0.0
        %980 = vadd.xlane.f32.xlu0 %v979
        %v981 = vpop.xlane.xlu0 %980
        %v982 = vrcp.pop %v981
        %v983 = vmul.f32 %v978, %v982
        %v984 = vpack.c.bf16 %v983, %v983
        %985 = vrot.lane.b32.xlu0 %v789, 40
        %v986 = vpop.permute.xlu0 %985
        %v988 = vsel %vm792, %v984, 0
        %v991 = vsel %vm827, %v986, 0
        %993 = vmatpush.bf16.msra.mxu0 0
        %994 = vmatpush.bf16.msra.mxu0 0
        %995 = vmatpush.bf16.msra.mxu0 0
        %996 = vmatpush.bf16.msra.mxu0 0
        %997 = vmatpush.bf16.msra.mxu0 0
        %998 = vmatpush.bf16.msra.mxu0 0
        %999 = vmatpush.bf16.msra.mxu0 0
        %1000 = vmatpush.bf16.msra.mxu0 %v991
        %1001 = vmatmul.bf16.gmra.mxu0 %v988
        %v1002 = vpop.f32.mrf.mxu0
        %v1003 = vadd.f32 0.0, %v1002
        %v1004 = vpop.f32.mrf.mxu0
        %1005 = vdwg.mxu0
        %1007 = vrot.lane.b32.xlu0 %v895, 8
        %v1008 = vpop.permute.xlu0 %1007
        %1011 = vrot.lane.b32.xlu0 %v949, 16
        %v1012 = vpop.permute.xlu0 %1011
        %1015 = vrot.lane.b32.xlu0 %v1003, 24
        %v1016 = vpop.permute.xlu0 %1015
        %v1018 = vsel %vm792, %v841, %v1008
        %vm1019 = vcmask 130048
        %v1020 = vsel %vm1019, %v1018, %v1012
        %vm1021 = vcmask 195584
        %v1022 = vsel %vm1021, %v1020, %v1016
        %v1023 = vpack.c.bf16 %v1022, %v1022
        %v1024 = vld [vmem:[%s8] sm:$0xf]
        %v1025 = vld [vmem:[%s8 + $0x4] sm:$0xf]
        %v1026 = vld [vmem:[%s8 + $0x8] sm:$0xf]
        %v1027 = vld [vmem:[%s8 + $0xc] sm:$0xf]
        %v1028 = vld [vmem:[%s9] sm:$0x1]
        %v1030 = vperm.slane %v1028, 0
        %v1036 = vunpack.c.l.b16 %v1024
        %v1037 = vunpack.c.l.b16 %v1025
        %v1038 = vunpack.c.l.b16 %v1026
        %v1039 = vunpack.c.l.b16 %v1027
        %v1040 = vpack.c.b16 %v1037, %v1036
        %v1041 = vpack.c.b16 %v1039, %v1038
        %v1045 = vsel %vm704, %v1023, 0
        %1047 = vmatpush.bf16.msra.mxu0 0
        %1048 = vmatpush.bf16.msra.mxu0 0
        %1049 = vmatpush.bf16.msra.mxu0 0
        %1050 = vmatpush.bf16.msra.mxu0 0
        %1051 = vmatpush.bf16.msra.mxu0 0
        %1052 = vmatpush.bf16.msra.mxu0 0
        %1053 = vmatpush.bf16.msra.mxu0 %v1041
        %1054 = vmatpush.bf16.msra.mxu0 %v1040
        %1055 = vmatmul.bf16.gmra.mxu0 %v1045
        %v1056 = vpop.f32.mrf.mxu0
        %v1057 = vadd.f32 %v1030, %v1056
        %v1058 = vpop.f32.mrf.mxu0
        %1059 = vdwg.mxu0
        %v1060 = vadd.f32 %v741, %v1057
        %v1061 = vld [vmem:[%s10] sm:$0x1]
        %v1062 = vld [vmem:[%s11] sm:$0x1]
        %v1063 = vsel %vm704, %v1060, 0.0
        %1064 = vadd.xlane.f32.xlu0 %v1063
        %v1065 = vpop.xlane.xlu0 %1064
        %v1066 = vmul.f32 %v1065, %v714
        %v1067 = vsub.f32 %v1060, %v1066
        %v1068 = vmul.f32 %v1067, %v1067
        %v1069 = vsel %vm704, %v1068, 0.0
        %1070 = vadd.xlane.f32.xlu0 %v1069
        %v1071 = vpop.xlane.xlu0 %1070
        %v1072 = vmul.f32 %v1071, %v714
        %v1073 = vadd.f32 %v1072, 1e-12
        %v1074 = vrsqrt.pop %v1073
        %v1075 = vmul.f32 %v1074, %v1073
        %v1076 = vmul.f32 %v1075, %v1074
        %v1077 = vmul.f32 0.5, %v1076
        %v1078 = vsub.f32 1.5, %v1077
        %v1079 = vmul.f32 %v1074, %v1078
        %vm1080 = vweird.f32 %v1073
        %vm1081 = vweird.f32 %v1074
        %vm1082 = vmor %vm1080, %vm1081
        %v1083 = vsel %vm1082, %v1074, %v1079
        %v1084 = vmul.f32 %v1067, %v1083
        %v1086 = vperm.slane %v1061, 0
        %v1088 = vmul.f32 %v1084, %v1086
        %v1090 = vperm.slane %v1062, 0
        %v1092 = vadd.f32 %v1088, %v1090
        %v1093 = vpack.c.bf16 %v1092, %v1092
        %v1094 = vld [vmem:[%s12] sm:$0xf]
        %v1095 = vld [vmem:[%s12 + $0x4] sm:$0xf]
        %v1096 = vld [vmem:[%s12 + $0x8] sm:$0xf]
        %v1097 = vld [vmem:[%s12 + $0xc] sm:$0xf]
        %v1098 = vld [vmem:[%s13] sm:$0x1]
        %v1100 = vperm.slane %v1098, 0
        %v1106 = vunpack.c.l.b16 %v1094
        %v1107 = vunpack.c.l.b16 %v1095
        %v1108 = vunpack.c.l.b16 %v1096
        %v1109 = vunpack.c.l.b16 %v1097
        %v1110 = vpack.c.b16 %v1107, %v1106
        %v1111 = vpack.c.b16 %v1109, %v1108
        %v1115 = vsel %vm704, %v1093, 0
        %1117 = vmatpush.bf16.msra.mxu0 0
        %1118 = vmatpush.bf16.msra.mxu0 0
        %1119 = vmatpush.bf16.msra.mxu0 0
        %1120 = vmatpush.bf16.msra.mxu0 0
        %1121 = vmatpush.bf16.msra.mxu0 0
        %1122 = vmatpush.bf16.msra.mxu0 0
        %1123 = vmatpush.bf16.msra.mxu0 %v1111
        %1124 = vmatpush.bf16.msra.mxu0 %v1110
        %1125 = vmatmul.bf16.gmra.mxu0 %v1115
        %v1126 = vpop.f32.mrf.mxu0
        %v1127 = vadd.f32 %v1100, %v1126
        %v1128 = vpop.f32.mrf.mxu0
        %1129 = vdwg.mxu0
        %v1130 = vmul.f32 %v1127, 0.5
        %v1131 = vmul.f32 %v1127, 0.044715
        %v1132 = vmul.f32 %v1131, %v1127
        %v1133 = vmul.f32 %v1132, %v1127
        %v1134 = vadd.f32 %v1127, %v1133
        %v1135 = vmul.f32 %v1134, 0.7978846
        %v1136 = vtanh.pop %v1135
        %v1137 = vadd.f32 %v1136, 1.0
        %v1138 = vmul.f32 %v1130, %v1137
        %v1139 = vpack.c.bf16 %v1138, %v1138
        %v1140 = vld [vmem:[%s14] sm:$0xf]
        %v1141 = vld [vmem:[%s14 + $0x4] sm:$0xf]
        %v1142 = vld [vmem:[%s14 + $0x8] sm:$0xf]
        %v1143 = vld [vmem:[%s14 + $0xc] sm:$0xf]
        %v1144 = vld [vmem:[%s14 + $0x10] sm:$0xf]
        %v1145 = vld [vmem:[%s14 + $0x14] sm:$0xf]
        %v1146 = vld [vmem:[%s14 + $0x18] sm:$0xf]
        %v1147 = vld [vmem:[%s14 + $0x1c] sm:$0xf]
        %v1148 = vld [vmem:[%s14 + $0x20] sm:$0xf]
        %v1149 = vld [vmem:[%s14 + $0x24] sm:$0xf]
        %v1150 = vld [vmem:[%s14 + $0x28] sm:$0xf]
        %v1151 = vld [vmem:[%s14 + $0x2c] sm:$0xf]
        %v1152 = vld [vmem:[%s14 + $0x30] sm:$0xf]
        %v1153 = vld [vmem:[%s14 + $0x34] sm:$0xf]
        %v1154 = vld [vmem:[%s14 + $0x38] sm:$0xf]
        %v1155 = vld [vmem:[%s14 + $0x3c] sm:$0xf]
        %v1156 = vld [vmem:[%s15] sm:$0x1]
        %v1158 = vperm.slane %v1156, 0
        %v1176 = vunpack.c.l.b16 %v1140
        %v1177 = vunpack.c.l.b16 %v1141
        %v1178 = vunpack.c.l.b16 %v1142
        %v1179 = vunpack.c.l.b16 %v1143
        %v1180 = vunpack.c.l.b16 %v1144
        %v1181 = vunpack.c.l.b16 %v1145
        %v1182 = vunpack.c.l.b16 %v1146
        %v1183 = vunpack.c.l.b16 %v1147
        %v1184 = vunpack.c.l.b16 %v1148
        %v1185 = vunpack.c.l.b16 %v1149
        %v1186 = vunpack.c.l.b16 %v1150
        %v1187 = vunpack.c.l.b16 %v1151
        %v1188 = vunpack.c.l.b16 %v1152
        %v1189 = vunpack.c.l.b16 %v1153
        %v1190 = vunpack.c.l.b16 %v1154
        %v1191 = vunpack.c.l.b16 %v1155
        %v1192 = vpack.c.b16 %v1177, %v1176
        %v1193 = vpack.c.b16 %v1179, %v1178
        %v1194 = vpack.c.b16 %v1181, %v1180
        %v1195 = vpack.c.b16 %v1183, %v1182
        %v1196 = vpack.c.b16 %v1185, %v1184
        %v1197 = vpack.c.b16 %v1187, %v1186
        %v1198 = vpack.c.b16 %v1189, %v1188
        %v1199 = vpack.c.b16 %v1191, %v1190
        %1208 = vmatpush.bf16.msra.mxu0 %v1199
        %1209 = vmatpush.bf16.msra.mxu0 %v1198
        %1210 = vmatpush.bf16.msra.mxu0 %v1197
        %1211 = vmatpush.bf16.msra.mxu0 %v1196
        %1212 = vmatpush.bf16.msra.mxu0 %v1195
        %1213 = vmatpush.bf16.msra.mxu0 %v1194
        %1214 = vmatpush.bf16.msra.mxu0 %v1193
        %1215 = vmatpush.bf16.msra.mxu0 %v1192
        %1216 = vmatmul.bf16.gmra.mxu0 %v1139
        %v1217 = vpop.f32.mrf.mxu0
        %v1218 = vadd.f32 %v1158, %v1217
        %v1219 = vpop.f32.mrf.mxu0
        %1220 = vdwg.mxu0
        %v1221 = vadd.f32 %v1092, %v1218
        %v1222 = vld [vmem:[%s16] sm:$0x1]
        %v1223 = vld [vmem:[%s17] sm:$0x1]
        %v1224 = vsel %vm704, %v1221, 0.0
        %1225 = vadd.xlane.f32.xlu0 %v1224
        %v1226 = vpop.xlane.xlu0 %1225
        %v1227 = vmul.f32 %v1226, %v714
        %v1228 = vsub.f32 %v1221, %v1227
        %v1229 = vmul.f32 %v1228, %v1228
        %v1230 = vsel %vm704, %v1229, 0.0
        %1231 = vadd.xlane.f32.xlu0 %v1230
        %v1232 = vpop.xlane.xlu0 %1231
        %v1233 = vmul.f32 %v1232, %v714
        %v1234 = vadd.f32 %v1233, 1e-12
        %v1235 = vrsqrt.pop %v1234
        %v1236 = vmul.f32 %v1235, %v1234
        %v1237 = vmul.f32 %v1236, %v1235
        %v1238 = vmul.f32 0.5, %v1237
        %v1239 = vsub.f32 1.5, %v1238
        %v1240 = vmul.f32 %v1235, %v1239
        %vm1241 = vweird.f32 %v1234
        %vm1242 = vweird.f32 %v1235
        %vm1243 = vmor %vm1241, %vm1242
        %v1244 = vsel %vm1243, %v1235, %v1240
        %v1245 = vmul.f32 %v1228, %v1244
        %v1247 = vperm.slane %v1222, 0
        %v1249 = vmul.f32 %v1245, %v1247
        %v1251 = vperm.slane %v1223, 0
        %v1253 = vadd.f32 %v1249, %v1251
        %v1254 = vpack.c.bf16 %v1253, %v1253
        %s1255 = scalar_lea.vmem %s6, 16
        %v1256 = vld [vmem:[%s1255] sm:$0xf]
        %v1257 = vld [vmem:[%s1255 + $0x4] sm:$0xf]
        %v1258 = vld [vmem:[%s1255 + $0x8] sm:$0xf]
        %v1259 = vld [vmem:[%s1255 + $0xc] sm:$0xf]
        %s1260 = scalar_lea.vmem %s7, 1
        %v1261 = vld [vmem:[%s1260] sm:$0x1]
        %v1263 = vperm.slane %v1261, 0
        %v1269 = vunpack.c.l.b16 %v1256
        %v1270 = vunpack.c.l.b16 %v1257
        %v1271 = vunpack.c.l.b16 %v1258
        %v1272 = vunpack.c.l.b16 %v1259
        %v1273 = vpack.c.b16 %v1270, %v1269
        %v1274 = vpack.c.b16 %v1272, %v1271
        %v1278 = vsel %vm704, %v1254, 0
        %1280 = vmatpush.bf16.msra.mxu0 0
        %1281 = vmatpush.bf16.msra.mxu0 0
        %1282 = vmatpush.bf16.msra.mxu0 0
        %1283 = vmatpush.bf16.msra.mxu0 0
        %1284 = vmatpush.bf16.msra.mxu0 0
        %1285 = vmatpush.bf16.msra.mxu0 0
        %1286 = vmatpush.bf16.msra.mxu0 %v1274
        %1287 = vmatpush.bf16.msra.mxu0 %v1273
        %1288 = vmatmul.bf16.gmra.mxu0 %v1278
        %v1289 = vpop.f32.mrf.mxu0
        %v1290 = vadd.f32 %v1263, %v1289
        %v1291 = vpop.f32.mrf.mxu0
        %1292 = vdwg.mxu0
        %v1293 = vpack.c.bf16 %v1290, %v1290
        %v1295 = vunpack.c.l.b16 %v1293
        %v1296 = vpack.c.b16 %v1295, %v1295
        %1297 = vrot.lane.b32.xlu0 %v1296, 96
        %v1298 = vpop.permute.xlu0 %1297
        %v1300 = vsel %vm792, %v1293, 0
        %v1303 = vsel %vm792, %v1298, 0
        %1305 = vmatpush.bf16.xpose.msra.mxu0 0
        %1306 = vmatpush.bf16.xpose.msra.mxu0 0
        %1307 = vmatpush.bf16.xpose.msra.mxu0 0
        %1308 = vmatpush.bf16.xpose.msra.mxu0 0
        %1309 = vmatpush.bf16.xpose.msra.mxu0 0
        %1310 = vmatpush.bf16.xpose.msra.mxu0 0
        %1311 = vmatpush.bf16.xpose.msra.mxu0 0
        %1312 = vmatpush.bf16.xpose.msra.mxu0 %v1303
        %1313 = vmatmul.bf16.gmra.mxu0 %v1300
        %v1314 = vpop.f32.mrf.mxu0
        %v1315 = vadd.f32 0.0, %v1314
        %v1316 = vpop.f32.mrf.mxu0
        %1317 = vdwg.mxu0
        %v1318 = vmul.f32 %v1315, 0.35355338
        %v1319 = vadd.f32 %v1318, %v747
        %v1320 = vmul.f32 %v1319, 1.442695
        %v1321 = vpow.pop %v1320
        %v1322 = vsel %vm792, %v1321, 0.0
        %1323 = vadd.xlane.f32.xlu0 %v1322
        %v1324 = vpop.xlane.xlu0 %1323
        %v1325 = vrcp.pop %v1324
        %v1326 = vmul.f32 %v1321, %v1325
        %v1327 = vpack.c.bf16 %v1326, %v1326
        %1328 = vrot.lane.b32.xlu0 %v1296, 64
        %v1329 = vpop.permute.xlu0 %1328
        %v1331 = vsel %vm792, %v1327, 0
        %v1334 = vsel %vm827, %v1329, 0
        %1336 = vmatpush.bf16.msra.mxu0 0
        %1337 = vmatpush.bf16.msra.mxu0 0
        %1338 = vmatpush.bf16.msra.mxu0 0
        %1339 = vmatpush.bf16.msra.mxu0 0
        %1340 = vmatpush.bf16.msra.mxu0 0
        %1341 = vmatpush.bf16.msra.mxu0 0
        %1342 = vmatpush.bf16.msra.mxu0 0
        %1343 = vmatpush.bf16.msra.mxu0 %v1334
        %1344 = vmatmul.bf16.gmra.mxu0 %v1331
        %v1345 = vpop.f32.mrf.mxu0
        %v1346 = vadd.f32 0.0, %v1345
        %v1347 = vpop.f32.mrf.mxu0
        %1348 = vdwg.mxu0
        %1349 = vrot.lane.b32.xlu0 %v1296, 120
        %v1350 = vpop.permute.xlu0 %1349
        %1351 = vrot.lane.b32.xlu0 %v1296, 88
        %v1352 = vpop.permute.xlu0 %1351
        %v1354 = vsel %vm792, %v1350, 0
        %v1357 = vsel %vm792, %v1352, 0
        %1359 = vmatpush.bf16.xpose.msra.mxu0 0
        %1360 = vmatpush.bf16.xpose.msra.mxu0 0
        %1361 = vmatpush.bf16.xpose.msra.mxu0 0
        %1362 = vmatpush.bf16.xpose.msra.mxu0 0
        %1363 = vmatpush.bf16.xpose.msra.mxu0 0
        %1364 = vmatpush.bf16.xpose.msra.mxu0 0
        %1365 = vmatpush.bf16.xpose.msra.mxu0 0
        %1366 = vmatpush.bf16.xpose.msra.mxu0 %v1357
        %1367 = vmatmul.bf16.gmra.mxu0 %v1354
        %v1368 = vpop.f32.mrf.mxu0
        %v1369 = vadd.f32 0.0, %v1368
        %v1370 = vpop.f32.mrf.mxu0
        %1371 = vdwg.mxu0
        %v1372 = vmul.f32 %v1369, 0.35355338
        %v1373 = vadd.f32 %v1372, %v747
        %v1374 = vmul.f32 %v1373, 1.442695
        %v1375 = vpow.pop %v1374
        %v1376 = vsel %vm792, %v1375, 0.0
        %1377 = vadd.xlane.f32.xlu0 %v1376
        %v1378 = vpop.xlane.xlu0 %1377
        %v1379 = vrcp.pop %v1378
        %v1380 = vmul.f32 %v1375, %v1379
        %v1381 = vpack.c.bf16 %v1380, %v1380
        %1382 = vrot.lane.b32.xlu0 %v1296, 56
        %v1383 = vpop.permute.xlu0 %1382
        %v1385 = vsel %vm792, %v1381, 0
        %v1388 = vsel %vm827, %v1383, 0
        %1390 = vmatpush.bf16.msra.mxu0 0
        %1391 = vmatpush.bf16.msra.mxu0 0
        %1392 = vmatpush.bf16.msra.mxu0 0
        %1393 = vmatpush.bf16.msra.mxu0 0
        %1394 = vmatpush.bf16.msra.mxu0 0
        %1395 = vmatpush.bf16.msra.mxu0 0
        %1396 = vmatpush.bf16.msra.mxu0 0
        %1397 = vmatpush.bf16.msra.mxu0 %v1388
        %1398 = vmatmul.bf16.gmra.mxu0 %v1385
        %v1399 = vpop.f32.mrf.mxu0
        %v1400 = vadd.f32 0.0, %v1399
        %v1401 = vpop.f32.mrf.mxu0
        %1402 = vdwg.mxu0
        %1403 = vrot.lane.b32.xlu0 %v1296, 112
        %v1404 = vpop.permute.xlu0 %1403
        %1405 = vrot.lane.b32.xlu0 %v1296, 80
        %v1406 = vpop.permute.xlu0 %1405
        %v1408 = vsel %vm792, %v1404, 0
        %v1411 = vsel %vm792, %v1406, 0
        %1413 = vmatpush.bf16.xpose.msra.mxu0 0
        %1414 = vmatpush.bf16.xpose.msra.mxu0 0
        %1415 = vmatpush.bf16.xpose.msra.mxu0 0
        %1416 = vmatpush.bf16.xpose.msra.mxu0 0
        %1417 = vmatpush.bf16.xpose.msra.mxu0 0
        %1418 = vmatpush.bf16.xpose.msra.mxu0 0
        %1419 = vmatpush.bf16.xpose.msra.mxu0 0
        %1420 = vmatpush.bf16.xpose.msra.mxu0 %v1411
        %1421 = vmatmul.bf16.gmra.mxu0 %v1408
        %v1422 = vpop.f32.mrf.mxu0
        %v1423 = vadd.f32 0.0, %v1422
        %v1424 = vpop.f32.mrf.mxu0
        %1425 = vdwg.mxu0
        %v1426 = vmul.f32 %v1423, 0.35355338
        %v1427 = vadd.f32 %v1426, %v747
        %v1428 = vmul.f32 %v1427, 1.442695
        %v1429 = vpow.pop %v1428
        %v1430 = vsel %vm792, %v1429, 0.0
        %1431 = vadd.xlane.f32.xlu0 %v1430
        %v1432 = vpop.xlane.xlu0 %1431
        %v1433 = vrcp.pop %v1432
        %v1434 = vmul.f32 %v1429, %v1433
        %v1435 = vpack.c.bf16 %v1434, %v1434
        %1436 = vrot.lane.b32.xlu0 %v1296, 48
        %v1437 = vpop.permute.xlu0 %1436
        %v1439 = vsel %vm792, %v1435, 0
        %v1442 = vsel %vm827, %v1437, 0
        %1444 = vmatpush.bf16.msra.mxu0 0
        %1445 = vmatpush.bf16.msra.mxu0 0
        %1446 = vmatpush.bf16.msra.mxu0 0
        %1447 = vmatpush.bf16.msra.mxu0 0
        %1448 = vmatpush.bf16.msra.mxu0 0
        %1449 = vmatpush.bf16.msra.mxu0 0
        %1450 = vmatpush.bf16.msra.mxu0 0
        %1451 = vmatpush.bf16.msra.mxu0 %v1442
        %1452 = vmatmul.bf16.gmra.mxu0 %v1439
        %v1453 = vpop.f32.mrf.mxu0
        %v1454 = vadd.f32 0.0, %v1453
        %v1455 = vpop.f32.mrf.mxu0
        %1456 = vdwg.mxu0
        %1457 = vrot.lane.b32.xlu0 %v1296, 104
        %v1458 = vpop.permute.xlu0 %1457
        %1459 = vrot.lane.b32.xlu0 %v1296, 72
        %v1460 = vpop.permute.xlu0 %1459
        %v1462 = vsel %vm792, %v1458, 0
        %v1465 = vsel %vm792, %v1460, 0
        %1467 = vmatpush.bf16.xpose.msra.mxu0 0
        %1468 = vmatpush.bf16.xpose.msra.mxu0 0
        %1469 = vmatpush.bf16.xpose.msra.mxu0 0
        %1470 = vmatpush.bf16.xpose.msra.mxu0 0
        %1471 = vmatpush.bf16.xpose.msra.mxu0 0
        %1472 = vmatpush.bf16.xpose.msra.mxu0 0
        %1473 = vmatpush.bf16.xpose.msra.mxu0 0
        %1474 = vmatpush.bf16.xpose.msra.mxu0 %v1465
        %1475 = vmatmul.bf16.gmra.mxu0 %v1462
        %v1476 = vpop.f32.mrf.mxu0
        %v1477 = vadd.f32 0.0, %v1476
        %v1478 = vpop.f32.mrf.mxu0
        %1479 = vdwg.mxu0
        %v1480 = vmul.f32 %v1477, 0.35355338
        %v1481 = vadd.f32 %v1480, %v747
        %v1482 = vmul.f32 %v1481, 1.442695
        %v1483 = vpow.pop %v1482
        %v1484 = vsel %vm792, %v1483, 0.0
        %1485 = vadd.xlane.f32.xlu0 %v1484
        %v1486 = vpop.xlane.xlu0 %1485
        %v1487 = vrcp.pop %v1486
        %v1488 = vmul.f32 %v1483, %v1487
        %v1489 = vpack.c.bf16 %v1488, %v1488
        %1490 = vrot.lane.b32.xlu0 %v1296, 40
        %v1491 = vpop.permute.xlu0 %1490
        %v1493 = vsel %vm792, %v1489, 0
        %v1496 = vsel %vm827, %v1491, 0
        %1498 = vmatpush.bf16.msra.mxu0 0
        %1499 = vmatpush.bf16.msra.mxu0 0
        %1500 = vmatpush.bf16.msra.mxu0 0
        %1501 = vmatpush.bf16.msra.mxu0 0
        %1502 = vmatpush.bf16.msra.mxu0 0
        %1503 = vmatpush.bf16.msra.mxu0 0
        %1504 = vmatpush.bf16.msra.mxu0 0
        %1505 = vmatpush.bf16.msra.mxu0 %v1496
        %1506 = vmatmul.bf16.gmra.mxu0 %v1493
        %v1507 = vpop.f32.mrf.mxu0
        %v1508 = vadd.f32 0.0, %v1507
        %v1509 = vpop.f32.mrf.mxu0
        %1510 = vdwg.mxu0
        %1512 = vrot.lane.b32.xlu0 %v1400, 8
        %v1513 = vpop.permute.xlu0 %1512
        %1516 = vrot.lane.b32.xlu0 %v1454, 16
        %v1517 = vpop.permute.xlu0 %1516
        %1520 = vrot.lane.b32.xlu0 %v1508, 24
        %v1521 = vpop.permute.xlu0 %1520
        %v1523 = vsel %vm792, %v1346, %v1513
        %v1524 = vsel %vm1019, %v1523, %v1517
        %v1525 = vsel %vm1021, %v1524, %v1521
        %v1526 = vpack.c.bf16 %v1525, %v1525
        %s1527 = scalar_lea.vmem %s8, 16
        %v1528 = vld [vmem:[%s1527] sm:$0xf]
        %v1529 = vld [vmem:[%s1527 + $0x4] sm:$0xf]
        %v1530 = vld [vmem:[%s1527 + $0x8] sm:$0xf]
        %v1531 = vld [vmem:[%s1527 + $0xc] sm:$0xf]
        %s1532 = scalar_lea.vmem %s9, 1
        %v1533 = vld [vmem:[%s1532] sm:$0x1]
        %v1535 = vperm.slane %v1533, 0
        %v1541 = vunpack.c.l.b16 %v1528
        %v1542 = vunpack.c.l.b16 %v1529
        %v1543 = vunpack.c.l.b16 %v1530
        %v1544 = vunpack.c.l.b16 %v1531
        %v1545 = vpack.c.b16 %v1542, %v1541
        %v1546 = vpack.c.b16 %v1544, %v1543
        %v1550 = vsel %vm704, %v1526, 0
        %1552 = vmatpush.bf16.msra.mxu0 0
        %1553 = vmatpush.bf16.msra.mxu0 0
        %1554 = vmatpush.bf16.msra.mxu0 0
        %1555 = vmatpush.bf16.msra.mxu0 0
        %1556 = vmatpush.bf16.msra.mxu0 0
        %1557 = vmatpush.bf16.msra.mxu0 0
        %1558 = vmatpush.bf16.msra.mxu0 %v1546
        %1559 = vmatpush.bf16.msra.mxu0 %v1545
        %1560 = vmatmul.bf16.gmra.mxu0 %v1550
        %v1561 = vpop.f32.mrf.mxu0
        %v1562 = vadd.f32 %v1535, %v1561
        %v1563 = vpop.f32.mrf.mxu0
        %1564 = vdwg.mxu0
        %v1565 = vadd.f32 %v1253, %v1562
        %s1566 = scalar_lea.vmem %s10, 1
        %v1567 = vld [vmem:[%s1566] sm:$0x1]
        %s1568 = scalar_lea.vmem %s11, 1
        %v1569 = vld [vmem:[%s1568] sm:$0x1]
        %v1570 = vsel %vm704, %v1565, 0.0
        %1571 = vadd.xlane.f32.xlu0 %v1570
        %v1572 = vpop.xlane.xlu0 %1571
        %v1573 = vmul.f32 %v1572, %v714
        %v1574 = vsub.f32 %v1565, %v1573
        %v1575 = vmul.f32 %v1574, %v1574
        %v1576 = vsel %vm704, %v1575, 0.0
        %1577 = vadd.xlane.f32.xlu0 %v1576
        %v1578 = vpop.xlane.xlu0 %1577
        %v1579 = vmul.f32 %v1578, %v714
        %v1580 = vadd.f32 %v1579, 1e-12
        %v1581 = vrsqrt.pop %v1580
        %v1582 = vmul.f32 %v1581, %v1580
        %v1583 = vmul.f32 %v1582, %v1581
        %v1584 = vmul.f32 0.5, %v1583
        %v1585 = vsub.f32 1.5, %v1584
        %v1586 = vmul.f32 %v1581, %v1585
        %vm1587 = vweird.f32 %v1580
        %vm1588 = vweird.f32 %v1581
        %vm1589 = vmor %vm1587, %vm1588
        %v1590 = vsel %vm1589, %v1581, %v1586
        %v1591 = vmul.f32 %v1574, %v1590
        %v1593 = vperm.slane %v1567, 0
        %v1595 = vmul.f32 %v1591, %v1593
        %v1597 = vperm.slane %v1569, 0
        %v1599 = vadd.f32 %v1595, %v1597
        %v1600 = vpack.c.bf16 %v1599, %v1599
        %s1601 = scalar_lea.vmem %s12, 16
        %v1602 = vld [vmem:[%s1601] sm:$0xf]
        %v1603 = vld [vmem:[%s1601 + $0x4] sm:$0xf]
        %v1604 = vld [vmem:[%s1601 + $0x8] sm:$0xf]
        %v1605 = vld [vmem:[%s1601 + $0xc] sm:$0xf]
        %s1606 = scalar_lea.vmem %s13, 1
        %v1607 = vld [vmem:[%s1606] sm:$0x1]
        %v1609 = vperm.slane %v1607, 0
        %v1615 = vunpack.c.l.b16 %v1602
        %v1616 = vunpack.c.l.b16 %v1603
        %v1617 = vunpack.c.l.b16 %v1604
        %v1618 = vunpack.c.l.b16 %v1605
        %v1619 = vpack.c.b16 %v1616, %v1615
        %v1620 = vpack.c.b16 %v1618, %v1617
        %v1624 = vsel %vm704, %v1600, 0
        %1626 = vmatpush.bf16.msra.mxu0 0
        %1627 = vmatpush.bf16.msra.mxu0 0
        %1628 = vmatpush.bf16.msra.mxu0 0
        %1629 = vmatpush.bf16.msra.mxu0 0
        %1630 = vmatpush.bf16.msra.mxu0 0
        %1631 = vmatpush.bf16.msra.mxu0 0
        %1632 = vmatpush.bf16.msra.mxu0 %v1620
        %1633 = vmatpush.bf16.msra.mxu0 %v1619
        %1634 = vmatmul.bf16.gmra.mxu0 %v1624
        %v1635 = vpop.f32.mrf.mxu0
        %v1636 = vadd.f32 %v1609, %v1635
        %v1637 = vpop.f32.mrf.mxu0
        %1638 = vdwg.mxu0
        %v1639 = vmul.f32 %v1636, 0.5
        %v1640 = vmul.f32 %v1636, 0.044715
        %v1641 = vmul.f32 %v1640, %v1636
        %v1642 = vmul.f32 %v1641, %v1636
        %v1643 = vadd.f32 %v1636, %v1642
        %v1644 = vmul.f32 %v1643, 0.7978846
        %v1645 = vtanh.pop %v1644
        %v1646 = vadd.f32 %v1645, 1.0
        %v1647 = vmul.f32 %v1639, %v1646
        %v1648 = vpack.c.bf16 %v1647, %v1647
        %s1649 = scalar_lea.vmem %s14, 64
        %v1650 = vld [vmem:[%s1649] sm:$0xf]
        %v1651 = vld [vmem:[%s1649 + $0x4] sm:$0xf]
        %v1652 = vld [vmem:[%s1649 + $0x8] sm:$0xf]
        %v1653 = vld [vmem:[%s1649 + $0xc] sm:$0xf]
        %v1654 = vld [vmem:[%s1649 + $0x10] sm:$0xf]
        %v1655 = vld [vmem:[%s1649 + $0x14] sm:$0xf]
        %v1656 = vld [vmem:[%s1649 + $0x18] sm:$0xf]
        %v1657 = vld [vmem:[%s1649 + $0x1c] sm:$0xf]
        %v1658 = vld [vmem:[%s1649 + $0x20] sm:$0xf]
        %v1659 = vld [vmem:[%s1649 + $0x24] sm:$0xf]
        %v1660 = vld [vmem:[%s1649 + $0x28] sm:$0xf]
        %v1661 = vld [vmem:[%s1649 + $0x2c] sm:$0xf]
        %v1662 = vld [vmem:[%s1649 + $0x30] sm:$0xf]
        %v1663 = vld [vmem:[%s1649 + $0x34] sm:$0xf]
        %v1664 = vld [vmem:[%s1649 + $0x38] sm:$0xf]
        %v1665 = vld [vmem:[%s1649 + $0x3c] sm:$0xf]
        %s1666 = scalar_lea.vmem %s15, 1
        %v1667 = vld [vmem:[%s1666] sm:$0x1]
        %v1669 = vperm.slane %v1667, 0
        %v1687 = vunpack.c.l.b16 %v1650
        %v1688 = vunpack.c.l.b16 %v1651
        %v1689 = vunpack.c.l.b16 %v1652
        %v1690 = vunpack.c.l.b16 %v1653
        %v1691 = vunpack.c.l.b16 %v1654
        %v1692 = vunpack.c.l.b16 %v1655
        %v1693 = vunpack.c.l.b16 %v1656
        %v1694 = vunpack.c.l.b16 %v1657
        %v1695 = vunpack.c.l.b16 %v1658
        %v1696 = vunpack.c.l.b16 %v1659
        %v1697 = vunpack.c.l.b16 %v1660
        %v1698 = vunpack.c.l.b16 %v1661
        %v1699 = vunpack.c.l.b16 %v1662
        %v1700 = vunpack.c.l.b16 %v1663
        %v1701 = vunpack.c.l.b16 %v1664
        %v1702 = vunpack.c.l.b16 %v1665
        %v1703 = vpack.c.b16 %v1688, %v1687
        %v1704 = vpack.c.b16 %v1690, %v1689
        %v1705 = vpack.c.b16 %v1692, %v1691
        %v1706 = vpack.c.b16 %v1694, %v1693
        %v1707 = vpack.c.b16 %v1696, %v1695
        %v1708 = vpack.c.b16 %v1698, %v1697
        %v1709 = vpack.c.b16 %v1700, %v1699
        %v1710 = vpack.c.b16 %v1702, %v1701
        %1719 = vmatpush.bf16.msra.mxu0 %v1710
        %1720 = vmatpush.bf16.msra.mxu0 %v1709
        %1721 = vmatpush.bf16.msra.mxu0 %v1708
        %1722 = vmatpush.bf16.msra.mxu0 %v1707
        %1723 = vmatpush.bf16.msra.mxu0 %v1706
        %1724 = vmatpush.bf16.msra.mxu0 %v1705
        %1725 = vmatpush.bf16.msra.mxu0 %v1704
        %1726 = vmatpush.bf16.msra.mxu0 %v1703
        %1727 = vmatmul.bf16.gmra.mxu0 %v1648
        %v1728 = vpop.f32.mrf.mxu0
        %v1729 = vadd.f32 %v1669, %v1728
        %v1730 = vpop.f32.mrf.mxu0
        %1731 = vdwg.mxu0
        %v1732 = vadd.f32 %v1599, %v1729
        %s1733 = scalar_lea.vmem %s16, 1
        %v1734 = vld [vmem:[%s1733] sm:$0x1]
        %s1735 = scalar_lea.vmem %s17, 1
        %v1736 = vld [vmem:[%s1735] sm:$0x1]
        %v1737 = vsel %vm704, %v1732, 0.0
        %1738 = vadd.xlane.f32.xlu0 %v1737
        %v1739 = vpop.xlane.xlu0 %1738
        %v1740 = vmul.f32 %v1739, %v714
        %v1741 = vsub.f32 %v1732, %v1740
        %v1742 = vmul.f32 %v1741, %v1741
        %v1743 = vsel %vm704, %v1742, 0.0
        %1744 = vadd.xlane.f32.xlu0 %v1743
        %v1745 = vpop.xlane.xlu0 %1744
        %v1746 = vmul.f32 %v1745, %v714
        %v1747 = vadd.f32 %v1746, 1e-12
        %v1748 = vrsqrt.pop %v1747
        %v1749 = vmul.f32 %v1748, %v1747
        %v1750 = vmul.f32 %v1749, %v1748
        %v1751 = vmul.f32 0.5, %v1750
        %v1752 = vsub.f32 1.5, %v1751
        %v1753 = vmul.f32 %v1748, %v1752
        %vm1754 = vweird.f32 %v1747
        %vm1755 = vweird.f32 %v1748
        %vm1756 = vmor %vm1754, %vm1755
        %v1757 = vsel %vm1756, %v1748, %v1753
        %v1758 = vmul.f32 %v1741, %v1757
        %v1760 = vperm.slane %v1734, 0
        %v1762 = vmul.f32 %v1758, %v1760
        %v1764 = vperm.slane %v1736, 0
        %v1766 = vadd.f32 %v1762, %v1764
        %v1767 = vld [vmem:[%s18] sm:$0xff]
        %v1768 = vld [vmem:[%s18 + $0x8] sm:$0xff]
        %v1769 = vld [vmem:[%s18 + $0x10] sm:$0xff]
        %v1770 = vld [vmem:[%s18 + $0x18] sm:$0xff]
        %v1771 = vld [vmem:[%s19] sm:$0x1]
        %v1773 = vsel %vm704, %v1766, 0
        %1775 = vmatpush.msra.mxu0 0.0
        %1776 = vmatpush.msra.mxu0 0.0
        %1777 = vmatpush.msra.mxu0 0.0
        %1778 = vmatpush.msra.mxu0 0.0
        %1779 = vmatpush.msra.mxu0 0.0
        %1780 = vmatpush.msra.mxu0 0.0
        %1781 = vmatpush.msra.mxu0 0.0
        %1782 = vmatpush.msra.mxu0 0.0
        %1783 = vmatpush.msra.mxu0 0.0
        %1784 = vmatpush.msra.mxu0 0.0
        %1785 = vmatpush.msra.mxu0 0.0
        %1786 = vmatpush.msra.mxu0 0.0
        %1787 = vmatpush.msra.mxu0 %v1770
        %1788 = vmatpush.msra.mxu0 %v1769
        %1789 = vmatpush.msra.mxu0 %v1768
        %1790 = vmatpush.msra.mxu0 %v1767
        %1791 = vmatmul.f32.gmra.mxu0 %v1773
        %v1792 = vpop.f32.mrf.mxu0
        %v1793 = vadd.f32 %v1771, %v1792
        %1794 = vdwg.mxu0
        %v1795 = vtanh.pop %v1793
        %v1796 = vld [vmem:[%s20] sm:$0xff]
        %v1797 = vld [vmem:[%s20 + $0x8] sm:$0xff]
        %v1798 = vld [vmem:[%s20 + $0x10] sm:$0xff]
        %v1799 = vld [vmem:[%s20 + $0x18] sm:$0xff]
        %v1800 = vld [vmem:[%s21] sm:$0x1]
        %v1802 = vsel %vm704, %v1795, 0
        %1804 = vmatpush.msra.mxu0 0.0
        %1805 = vmatpush.msra.mxu0 0.0
        %1806 = vmatpush.msra.mxu0 0.0
        %1807 = vmatpush.msra.mxu0 0.0
        %1808 = vmatpush.msra.mxu0 0.0
        %1809 = vmatpush.msra.mxu0 0.0
        %1810 = vmatpush.msra.mxu0 0.0
        %1811 = vmatpush.msra.mxu0 0.0
        %1812 = vmatpush.msra.mxu0 0.0
        %1813 = vmatpush.msra.mxu0 0.0
        %1814 = vmatpush.msra.mxu0 0.0
        %1815 = vmatpush.msra.mxu0 0.0
        %1816 = vmatpush.msra.mxu0 %v1799
        %1817 = vmatpush.msra.mxu0 %v1798
        %1818 = vmatpush.msra.mxu0 %v1797
        %1819 = vmatpush.msra.mxu0 %v1796
        %1820 = vmatmul.f32.gmra.mxu0 %v1802
        %v1821 = vpop.f32.mrf.mxu0
        %v1822 = vadd.f32 %v1800, %v1821
        %1823 = vdwg.mxu0
        %1824 = vst [vmem:[%s653] sm:$0x1] %v1822
        %s1825 = sand.u32 %s498, 1
        %s1826 = scalar_lea.sflag [#allocation6], %s1825
        %s1827 = sand.u32 %s498, 1
        %s1828 = scalar_lea.vmem [#allocation5], %s1827
        // Predicated region
        $region105: #{bert_classifier_forward.1} parent=103 // pred_check
          %p1829 = pneg %p508
        $region106: #{bert_classifier_forward.1} parent=103 // pred_check_branch
          %1831 = sbr.rel (%p1829) target = $region108
        $region107: #{bert_classifier_forward.1} parent=103 // pred_region
          %1833 = vsyncadd %s1826, 0
          %s1834 = scalar_lea.hbm %s22, %s44
          %s1836 = sshll.u32 %s1828, 4
          %s1837 = int_to_ptr.vmem [resolvable:$true] %s1836
          %s1838 = sshll.u32 %s1834, 4
          %s1839 = int_to_ptr.hbm [resolvable:$true] %s1838
          %1841 = dma.vmem_to_hbm [thread:$0]  %s1837, 16, %s1839, %s1826
        $region108: #{bert_classifier_forward.1} parent=103 // pred_fallthru
          _
      $region104: #{bert_classifier_forward.1} parent=5 // pred_fallthru
        _
      %p1842 = scmp.le.s32.totalorder 2, %s39
      // Predicated region
      $region109: #{bert_classifier_forward.1} parent=5 // pred_check
        %p1843 = pneg %p1842
      $region110: #{bert_classifier_forward.1} parent=5 // pred_check_branch
        %1845 = sbr.rel (%p1843) target = $region112
      $region111: #{bert_classifier_forward.1} parent=5 // pred_region
        %s1846 = ssub.s32 %s39, 2
        // Predicated region
        $region113: #{bert_classifier_forward.1} parent=111 // pred_check
          %p1847 = pneg %p514
        $region114: #{bert_classifier_forward.1} parent=111 // pred_check_branch
          %1849 = sbr.rel (%p1847) target = $region116
        $region115: #{bert_classifier_forward.1} parent=111 // pred_region
          %s1850 = sand.u32 %s499, 1
          %s1851 = scalar_lea.sflag [#allocation6], %s1850
          %s1852 = sand.u32 %s499, 1
          %s1853 = scalar_lea.vmem [#allocation5], %s1852
          %1855 = dma.done %s1851, 16
        $region116: #{bert_classifier_forward.1} parent=111 // pred_fallthru
          _
      $region112: #{bert_classifier_forward.1} parent=5 // pred_fallthru
        _
    $region6: #{bert_classifier_forward.1} parent=1 // loop_footer
      %s43 = sadd.s32 1, %s39
    $region7: #{bert_classifier_forward.1} parent=1 // loop_footer_branch
      %38 = sbr.rel target = $region3
    $region8: #{bert_classifier_forward.1} parent=1 // loop_exit
      _
    %1856 = vsyncpa [#allocation6], 1
    %s1857 = scalar_lea.sflag [#allocation6], 1
    %1858 = vsyncpa %s1857, 1

</llo_original>
